<compile_context>
chip_gen: v6e
topology: v6e:2x2x1
jax: 0.10.0
libtpu: 0.0.40
codegen_flags: <defaults>
</compile_context>

<pallas_src>
import functools

import jax
import jax.numpy as jnp
from jax import lax
from jax.experimental import pallas as pl
from jax.experimental.pallas import tpu as pltpu


_SLAB_BUDGET_BYTES = 8 * 1024 * 1024    # budget for the (L*Bb, 8H) f32 slabs
_POOL_CHUNK_BUDGET = 4 * 1024 * 1024    # budget for a (chunk*Bb, F) conv tile


def _concat_row_blocks(blocks):
    """Concatenate 2-D (rows, C) value blocks along axis 0 (static count)."""
    return blocks[0] if len(blocks) == 1 else jnp.concatenate(blocks, axis=0)


# ---------------------------------------------------------------------------
# Pallas kernel: one batch block (Bb rows). Everything lives in VMEM.
# Combined gate-column layout (width 8H): [i_f, i_b, f_f, f_b, o_f, o_b, g_f, g_b]
# ---------------------------------------------------------------------------
def textrcnn_kernel(x_ref,                  # (L, Bb, E) embedded input, time-major, f32
                    wih_ref,                # (E, 8H)  fused input-proj weights
                    b_ref,                  # (1, 8H)  fused biases (b_ih + b_hh), f32
                    whh_ref,                # (2H, 8H) block-diagonal recurrent weights
                    whf_ref, whb_ref, wx_ref, bw_ref,   # W split: (H,F),(H,F),(E,F),(1,F)
                    fc_ref, bfc_ref,        # fc: (F, O), (1, O)
                    out_ref,                # (Bb, O) f32
                    hid_sc,                 # VMEM scratch (L*Bb, 2H) f32 hidden slab
                    *, hidden, pool_chunk):
    L, Bb, E = x_ref.shape
    H = hidden
    H2, H8 = 2 * H, 8 * H
    LB = L * Bb
    F_dim = whf_ref.shape[1]
    wd = wih_ref.dtype                      # MXU input dtype (f32 or bf16)

    x_all = x_ref[...].reshape(LB, E)       # (L*Bb, E) f32 activations

    # (1) Input projections for all timesteps & BOTH directions: ONE MXU matmul.
    pre = jnp.dot(x_all.astype(wd), wih_ref[...],
                  preferred_element_type=jnp.float32) + b_ref[...]      # (LB, 8H) f32

    # (2) fwd/bwd gate-input merge hoisted out of the recurrence: one bulk pass
    #     over `pre` (overlaps the hoisted matmul, not the serial MXU->EUP chain).
    #     gate_in[t] = fwd gate cols from pre[t], bwd gate cols from pre[L-1-t].
    fwd_lane = (lax.broadcasted_iota(jnp.int32, (Bb, H8), 1) % H2) < H
    gate_in = [jnp.where(fwd_lane,
                         pre[t * Bb:(t + 1) * Bb, :],
                         pre[(L - 1 - t) * Bb:(L - t) * Bb, :])
               for t in range(L)]

    whh = whh_ref[...]                                                  # (2H, 8H)
    h_cat = jnp.zeros((Bb, H2), jnp.float32)                            # [h_f | h_b]
    c_cat = jnp.zeros((Bb, H2), jnp.float32)                            # [c_f | c_b]

    # (3) Recurrence: ONE dependent MXU push + fused sigmoid/tanh per step.
    #     L is small & static here so full unroll is the recommended regime.
    # TODO(synk): for L > 16 switch to lax.fori_loop(..., unroll=2..4) to bound
    #             vreg live ranges (hid_sc writes would use pl.ds(t*Bb, Bb)).
    for t in range(L):
        hh = jnp.dot(h_cat.astype(wd), whh, preferred_element_type=jnp.float32)
        gates = gate_in[t] + hh                                         # (Bb, 8H)
        sig = jax.nn.sigmoid(gates[:, :6 * H])                          # [i|f|o] both dirs
        g_cat = jnp.tanh(gates[:, 6 * H:])                              # [g_f, g_b]
        i_cat = sig[:, 0:H2]
        f_cat = sig[:, H2:2 * H2]
        o_cat = sig[:, 2 * H2:3 * H2]
        c_cat = f_cat * c_cat + i_cat * g_cat
        h_cat = o_cat * jnp.tanh(c_cat)
        # ONE full-width (Bb, 2H) store per step (vs. two masked H-wide column
        # stores). hid_sc[t, H:2H] holds the *backward* hidden for time L-1-t;
        # that reversal is fixed up once per pool chunk below, off the serial
        # path. Every row/col of hid_sc is overwritten, so no zero-init needed.
        hid_sc[t * Bb:(t + 1) * Bb, :] = h_cat

    # (4) W + tanh + max-pool over time, chunked over the time axis with a
    #     running max so the full (L*Bb, F) conv slab is never materialized.
    whf, whb, wx, bw = whf_ref[...], whb_ref[...], wx_ref[...], bw_ref[...]
    pooled = None
    for c in range(L // pool_chunk):
        lo, hi = c * pool_chunk, (c + 1) * pool_chunk
        hf = hid_sc[lo * Bb:hi * Bb, :]                                  # stored order
        # Backward hidden for times [lo, hi) lives at row blocks L-1-u, reversed.
        hb = _concat_row_blocks(
            [hid_sc[(L - 1 - u) * Bb:(L - u) * Bb, :] for u in range(lo, hi)])
        xc = x_all[lo * Bb:hi * Bb, :]
        conv = jnp.tanh(
            jnp.dot(hf[:, :H].astype(wd), whf, preferred_element_type=jnp.float32)
            + jnp.dot(hb[:, H:].astype(wd), whb, preferred_element_type=jnp.float32)
            + jnp.dot(xc.astype(wd), wx, preferred_element_type=jnp.float32)
            + bw)                                                        # (chunk*Bb, F)
        cmax = jnp.max(conv.reshape(pool_chunk, Bb, F_dim), axis=0)      # (Bb, F)
        pooled = cmax if pooled is None else jnp.maximum(pooled, cmax)

    # (5) dropout = identity at eval; fc + sigmoid.
    # TODO(synk): out_size=2 -> masked (Bb,2) output stores and a 2-column MXU
    #             matmul; pad F / out_size toward 128 lanes at production sizes.
    logits = jnp.dot(pooled.astype(fc_ref.dtype), fc_ref[...],
                     preferred_element_type=jnp.float32) + bfc_ref[...]
    out_ref[...] = jax.nn.sigmoid(logits)


# ---------------------------------------------------------------------------
# Weight fusion (done once in the wrapper, pure JAX glue)
# ---------------------------------------------------------------------------
def _fuse_lstm_weights(params, hidden):
    """Fused input-proj / bias / block-diagonal recurrent weights.

    PyTorch per-direction gate order is [i, f, g, o]; the fused layout is
    [i_f, i_b, f_f, f_b, o_f, o_b, g_f, g_b] (per-gate [fwd, bwd] pairs, gate
    order i, f, o, g so the sigmoid gates are contiguous).
    """
    H = hidden
    gate_slices = [slice(0, H), slice(H, 2 * H), slice(3 * H, 4 * H), slice(2 * H, 3 * H)]
    wih_f, wih_b = params["wih_f"], params["wih_b"]
    whh_f, whh_b = params["whh_f"], params["whh_b"]
    b_f, b_b = params["b_f"], params["b_b"]

    wih_cat = jnp.concatenate(
        [jnp.concatenate([wih_f[:, s], wih_b[:, s]], axis=1) for s in gate_slices], axis=1)
    b_cat = jnp.concatenate(
        [jnp.concatenate([b_f[:, s], b_b[:, s]], axis=1) for s in gate_slices], axis=1)

    zH = jnp.zeros((H, H), jnp.float32)

    def pair(s):
        top = jnp.concatenate([whh_f[:, s], zH], axis=1)   # h_f feeds the fwd column
        bot = jnp.concatenate([zH, whh_b[:, s]], axis=1)   # h_b feeds the bwd column
        return jnp.concatenate([top, bot], axis=0)         # (2H, 2H)

    whh_blk = jnp.concatenate([pair(s) for s in gate_slices], axis=1)   # (2H, 8H)
    return wih_cat, b_cat, whh_blk


def _pick_batch_block(B, L, H, batch_block):
    """Generation-aware batch block: Bb=B on 1-TC chips, B/num_cores on megacore."""
    if batch_block is None:
        n_tc = getattr(jax.devices()[0], "num_cores", 1) or 1
        if n_tc > 1 and B % n_tc == 0 and (B // n_tc) % 8 == 0:
            Bb = B // n_tc          # one batch block per TensorCore (v7x megacore)
        else:
            Bb = B                  # v5e / v6e: single TC -> one big block, grid=(1,)
        # Bound the (L*Bb, 8H)-scaling VMEM slabs (pre / gate_in, f32).
        while Bb > 8 and Bb % 16 == 0 and L * Bb * 8 * H * 4 > _SLAB_BUDGET_BYTES:
            Bb //= 2
    else:
        Bb = min(batch_block, B)
    assert B % Bb == 0, "batch must be a multiple of the batch block"
    assert Bb == B or Bb % 8 == 0, "batch block must be a multiple of 8 sublanes"
    return Bb


# ---------------------------------------------------------------------------
# Wrapper
# ---------------------------------------------------------------------------
def textrcnn_forward(x_ids, params, *, hidden, batch_block=None,
                     weight_dtype=jnp.bfloat16):
    """x_ids: (B, L) int32 token ids. Returns (B, output_size) f32.

    weight_dtype=bf16 (default, recommended on v6e/v7x) keeps all activations,
    gates and biases in f32; only MXU operands are bf16, accumulation is f32.
    """
    emb = params["emb"]
    # Gather directly in time-major order: transposing the int32 id matrix is
    # free; transposing the embedded (B, L, E) float tensor is an HBM round-trip.
    x_lbe = jnp.take(emb, x_ids.T, axis=0).astype(jnp.float32)           # (L, B, E)
    L, B, E = x_lbe.shape
    H = hidden
    F_dim = params["w"].shape[1]
    out_size = params["fc"].shape[1]

    Bb = _pick_batch_block(B, L, H, batch_block)
    grid = (B // Bb,)

    # Largest divisor of L whose (chunk*Bb, F) conv tile fits the chunk budget.
    pool_chunk = 1
    for d in range(L, 0, -1):
        if L % d == 0 and d * Bb * F_dim * 4 <= _POOL_CHUNK_BUDGET:
            pool_chunk = d
            break

    wih_cat, b_cat, whh_blk = _fuse_lstm_weights(params, hidden)
    w = params["w"]
    wd = weight_dtype
    weights = (wih_cat.astype(wd), b_cat, whh_blk.astype(wd),
               w[:H].astype(wd), w[H:2 * H].astype(wd), w[2 * H:].astype(wd),
               params["bw"], params["fc"].astype(wd), params["bfc"])

    def full_spec(a):
        zeros = (0,) * a.ndim
        # TODO(synk): constant-index weights are still double-buffered by the
        #             pipeline; pipeline_mode=pl.Buffered(1) (or a one-shot
        #             manual copy into scratch) would halve their VMEM on v7x.
        return pl.BlockSpec(a.shape, lambda b, _z=zeros: _z)

    return pl.pallas_call(
        functools.partial(textrcnn_kernel, hidden=H, pool_chunk=pool_chunk),
        out_shape=jax.ShapeDtypeStruct((B, out_size), jnp.float32),
        grid_spec=pltpu.PrefetchScalarGridSpec(
            num_scalar_prefetch=0,
            grid=grid,
            in_specs=[pl.BlockSpec((L, Bb, E), lambda b: (0, b, 0))]
                     + [full_spec(a) for a in weights],
            out_specs=pl.BlockSpec((Bb, out_size), lambda b: (b, 0)),
            scratch_shapes=[pltpu.VMEM((L * Bb, 2 * H), jnp.float32)],
        ),
        compiler_params=pltpu.CompilerParams(
            dimension_semantics=("parallel",),        # batch blocks -> 2 TCs on v7x
            vmem_limit_bytes=48 * 1024 * 1024,        # within v5e/v6e/v7x physical VMEM
        ),
    )(x_lbe, *weights)


# ---------------------------------------------------------------------------
# Pure-JAX reference (mirrors the PyTorch forward, eval mode)
# ---------------------------------------------------------------------------
def textrcnn_reference(x_ids, params, *, hidden):
    H = hidden
    emb = params["emb"]
    embed_x = jnp.take(emb, x_ids, axis=0)                     # (B, L, E)
    x_lbe = jnp.transpose(embed_x, (1, 0, 2)).astype(jnp.float32)
    L, B, E = x_lbe.shape

    def make_step(wih, whh, b):
        def step(carry, x_t):
            h, c = carry
            gates = x_t @ wih + h @ whh + b
            i = jax.nn.sigmoid(gates[:, 0:H])
            f = jax.nn.sigmoid(gates[:, H:2 * H])
            g = jnp.tanh(gates[:, 2 * H:3 * H])
            o = jax.nn.sigmoid(gates[:, 3 * H:4 * H])
            c = f * c + i * g
            h = o * jnp.tanh(c)
            return (h, c), h
        return step

    z = jnp.zeros((B, H), jnp.float32)
    _, hs_f = lax.scan(make_step(params["wih_f"], params["whh_f"], params["b_f"]),
                       (z, z), x_lbe)
    _, hs_b = lax.scan(make_step(params["wih_b"], params["whh_b"], params["b_b"]),
                       (z, z), x_lbe[::-1])
    hs_b = hs_b[::-1]
    lstm_out = jnp.concatenate([hs_f, hs_b], axis=-1)          # (L, B, 2H)
    feat = jnp.concatenate([lstm_out, x_lbe], axis=-1)         # (L, B, 2H+E)
    conv_in = jnp.tanh(feat @ params["w"] + params["bw"])      # (L, B, F)
    pooled = jnp.max(conv_in, axis=0)                          # (B, F) max_pool1d over seq
    fc_out = pooled @ params["fc"] + params["bfc"]
    return jax.nn.sigmoid(fc_out)


# ---------------------------------------------------------------------------
# Deterministic parameter construction (synthetic, matches module shapes)
# ---------------------------------------------------------------------------
def make_params(key, *, vocab, embed, hidden, conv_feat, out_size):
    ks = jax.random.split(key, 16)
    s = 1.0 / jnp.sqrt(hidden)

    def unif(k, shape):
        return jax.random.uniform(k, shape, jnp.float32, -s, s)

    emb = 0.1 * jax.random.normal(ks[0], (vocab, embed), jnp.float32)

    # LSTM (PyTorch gate order i, f, g, o); biases bias_ih + bias_hh summed.
    wih_f = unif(ks[1], (embed, 4 * hidden))
    whh_f = unif(ks[2], (hidden, 4 * hidden))
    b_f = unif(ks[3], (1, 4 * hidden)) + unif(ks[4], (1, 4 * hidden))
    wih_b = unif(ks[5], (embed, 4 * hidden))
    whh_b = unif(ks[6], (hidden, 4 * hidden))
    b_b = unif(ks[7], (1, 4 * hidden)) + unif(ks[8], (1, 4 * hidden))

    d_in = embed + 2 * hidden
    w = unif(ks[9], (d_in, conv_feat))
    bw = unif(ks[10], (1, conv_feat))
    fc = unif(ks[11], (conv_feat, out_size))
    bfc = unif(ks[12], (1, out_size))

    return dict(emb=emb, wih_f=wih_f, whh_f=whh_f, b_f=b_f,
                wih_b=wih_b, whh_b=whh_b, b_b=b_b,
                w=w, bw=bw, fc=fc, bfc=bfc)


if __name__ == "__main__":
    # Synthetic config: vocab=50, embed=32, hidden=16, 1 bidirectional LSTM layer,
    # conv_feature_dim=32, output_size=2, batch=16, seq=8.
    # TODO(synk): num_lstm_layers > 1 (stacked LSTM) not implemented.
    VOCAB, EMBED, HIDDEN, CONV_F, OUT = 50, 32, 16, 32, 2
    B, L = 16, 8

    key = jax.random.PRNGKey(0)
    k_param, k_ids, k_len = jax.random.split(key, 3)
    params = make_params(k_param, vocab=VOCAB, embed=EMBED, hidden=HIDDEN,
                         conv_feat=CONV_F, out_size=OUT)

    x_ids = jax.random.randint(k_ids, (B, L), 0, VOCAB, dtype=jnp.int32)
    # x_seqlen is accepted but unused by the PyTorch forward (no packing).
    x_seqlen = jax.random.randint(k_len, (B,), 1, L + 1, dtype=jnp.int32)

    ref = jax.block_until_ready(textrcnn_reference(x_ids, params, hidden=HIDDEN))

    # f32 weights: tight check of the kernel structure against the reference.
    out_f32 = jax.block_until_ready(
        textrcnn_forward(x_ids, params, hidden=HIDDEN, weight_dtype=jnp.float32))
    assert out_f32.shape == (B, OUT), out_f32.shape
    assert jnp.allclose(out_f32, ref, atol=1e-4, rtol=1e-4), (out_f32, ref)

    # bf16 weights (default; recommended on v6e/v7x): looser numerical check.
    out_bf16 = jax.block_until_ready(
        textrcnn_forward(x_ids, params, hidden=HIDDEN))
    assert out_bf16.shape == (B, OUT), out_bf16.shape
    assert jnp.allclose(out_bf16, ref, atol=5e-2, rtol=5e-2), (out_bf16, ref)

    print("KERNEL_OK")
</pallas_src>

<mosaic_0001>
module attributes {stable_mosaic.version = 11 : i64} {
  func.func @textrcnn_kernel(%arg0: i32, %arg1: memref<8x16x32xf32, #tpu.memory_space<vmem>>, %arg2: memref<32x128xf32, #tpu.memory_space<vmem>>, %arg3: memref<1x128xf32, #tpu.memory_space<vmem>>, %arg4: memref<32x128xf32, #tpu.memory_space<vmem>>, %arg5: memref<16x32xf32, #tpu.memory_space<vmem>>, %arg6: memref<16x32xf32, #tpu.memory_space<vmem>>, %arg7: memref<32x32xf32, #tpu.memory_space<vmem>>, %arg8: memref<1x32xf32, #tpu.memory_space<vmem>>, %arg9: memref<32x2xf32, #tpu.memory_space<vmem>>, %arg10: memref<1x2xf32, #tpu.memory_space<vmem>>, %arg11: memref<16x2xf32, #tpu.memory_space<vmem>>, %arg12: memref<128x32xf32, #tpu.memory_space<vmem>>) attributes {dimension_semantics = [#tpu.dimension_semantics<parallel>], iteration_bounds = array<i64: 1>, scalar_prefetch = 0 : i64, scratch_operands = 1 : i64, tpu.core_type = #tpu.core_type<tc>, window_params = [{transform_indices = @transform_0, window_bounds = array<i64: 8, 16, 32>}, {pipeline_mode = #tpu.pipeline_mode<synchronous>, transform_indices = @transform_1, window_bounds = array<i64: 32, 128>}, {pipeline_mode = #tpu.pipeline_mode<synchronous>, transform_indices = @transform_2, window_bounds = array<i64: 1, 128>}, {pipeline_mode = #tpu.pipeline_mode<synchronous>, transform_indices = @transform_3, window_bounds = array<i64: 32, 128>}, {pipeline_mode = #tpu.pipeline_mode<synchronous>, transform_indices = @transform_4, window_bounds = array<i64: 16, 32>}, {pipeline_mode = #tpu.pipeline_mode<synchronous>, transform_indices = @transform_5, window_bounds = array<i64: 16, 32>}, {pipeline_mode = #tpu.pipeline_mode<synchronous>, transform_indices = @transform_6, window_bounds = array<i64: 32, 32>}, {pipeline_mode = #tpu.pipeline_mode<synchronous>, transform_indices = @transform_7, window_bounds = array<i64: 1, 32>}, {pipeline_mode = #tpu.pipeline_mode<synchronous>, transform_indices = @transform_8, window_bounds = array<i64: 32, 2>}, {pipeline_mode = #tpu.pipeline_mode<synchronous>, transform_indices = @transform_9, window_bounds = array<i64: 1, 2>}, {transform_indices = @transform_10, window_bounds = array<i64: 16, 2>}]} {
    %c0 = arith.constant 0 : index
    %c0_0 = arith.constant 0 : index
    %c0_1 = arith.constant 0 : index
    %0 = vector.load %arg1[%c0, %c0_0, %c0_1] : memref<8x16x32xf32, #tpu.memory_space<vmem>>, vector<8x16x32xf32>
    %1 = vector.shape_cast %0 : vector<8x16x32xf32> to vector<128x32xf32>
    %c0_2 = arith.constant 0 : index
    %c0_3 = arith.constant 0 : index
    %2 = vector.load %arg2[%c0_2, %c0_3] : memref<32x128xf32, #tpu.memory_space<vmem>>, vector<32x128xf32>
    %cst = arith.constant dense<0.000000e+00> : vector<128x128xf32>
    %3 = tpu.matmul %1, %2, %cst {dimension_numbers = #tpu.dot_dimension_numbers<[1], [0], [0], [1], [0, 0, 1, 1], [], []>} : vector<128x32xf32>, vector<32x128xf32>, vector<128x128xf32> -> vector<128x128xf32>
    %c0_4 = arith.constant 0 : index
    %c0_5 = arith.constant 0 : index
    %4 = vector.load %arg3[%c0_4, %c0_5] : memref<1x128xf32, #tpu.memory_space<vmem>>, vector<1x128xf32>
    %5 = vector.broadcast %4 : vector<1x128xf32> to vector<128x128xf32>
    %6 = arith.addf %3, %5 : vector<128x128xf32>
    %7 = tpu.iota {dimensions = array<i32: 1>} : vector<16x128xi32>
    %c32_i32 = arith.constant 32 : i32
    %c0_i32 = arith.constant 0 : i32
    %8 = arith.cmpi eq, %c32_i32, %c0_i32 : i32
    %c1_i32 = arith.constant 1 : i32
    %9 = arith.select %8, %c1_i32, %c32_i32 : i32
    %10 = vector.broadcast %9 : i32 to vector<16x128xi32>
    %11 = arith.remsi %7, %10 : vector<16x128xi32>
    %c0_i32_6 = arith.constant 0 : i32
    %12 = vector.broadcast %c0_i32_6 : i32 to vector<16x128xi32>
    %13 = arith.cmpi ne, %11, %12 : vector<16x128xi32>
    %c0_i32_7 = arith.constant 0 : i32
    %14 = vector.broadcast %c0_i32_7 : i32 to vector<16x128xi32>
    %15 = arith.cmpi slt, %11, %14 : vector<16x128xi32>
    %c0_i32_8 = arith.constant 0 : i32
    %16 = arith.cmpi slt, %9, %c0_i32_8 : i32
    %17 = vector.broadcast %16 : i1 to vector<16x128xi1>
    %18 = vector.broadcast %17 : vector<16x128xi1> to vector<16x128xi1>
    %19 = arith.xori %15, %18 : vector<16x128xi1>
    %20 = arith.andi %19, %13 : vector<16x128xi1>
    %21 = vector.broadcast %9 : i32 to vector<16x128xi32>
    %22 = arith.addi %11, %21 : vector<16x128xi32>
    %23 = arith.select %20, %22, %11 : vector<16x128xi1>, vector<16x128xi32>
    %c16_i32 = arith.constant 16 : i32
    %24 = vector.broadcast %c16_i32 : i32 to vector<16x128xi32>
    %25 = arith.cmpi slt, %23, %24 : vector<16x128xi32>
    %26 = vector.extract_strided_slice %6 {offsets = [0, 0], sizes = [16, 128], strides = [1, 1]} : vector<128x128xf32> to vector<16x128xf32>
    %27 = vector.extract_strided_slice %6 {offsets = [112, 0], sizes = [16, 128], strides = [1, 1]} : vector<128x128xf32> to vector<16x128xf32>
    %28 = arith.select %25, %26, %27 : vector<16x128xi1>, vector<16x128xf32>
    %29 = vector.extract_strided_slice %6 {offsets = [16, 0], sizes = [16, 128], strides = [1, 1]} : vector<128x128xf32> to vector<16x128xf32>
    %30 = vector.extract_strided_slice %6 {offsets = [96, 0], sizes = [16, 128], strides = [1, 1]} : vector<128x128xf32> to vector<16x128xf32>
    %31 = arith.select %25, %29, %30 : vector<16x128xi1>, vector<16x128xf32>
    %32 = vector.extract_strided_slice %6 {offsets = [32, 0], sizes = [16, 128], strides = [1, 1]} : vector<128x128xf32> to vector<16x128xf32>
    %33 = vector.extract_strided_slice %6 {offsets = [80, 0], sizes = [16, 128], strides = [1, 1]} : vector<128x128xf32> to vector<16x128xf32>
    %34 = arith.select %25, %32, %33 : vector<16x128xi1>, vector<16x128xf32>
    %35 = vector.extract_strided_slice %6 {offsets = [48, 0], sizes = [16, 128], strides = [1, 1]} : vector<128x128xf32> to vector<16x128xf32>
    %36 = vector.extract_strided_slice %6 {offsets = [64, 0], sizes = [16, 128], strides = [1, 1]} : vector<128x128xf32> to vector<16x128xf32>
    %37 = arith.select %25, %35, %36 : vector<16x128xi1>, vector<16x128xf32>
    %38 = vector.extract_strided_slice %6 {offsets = [64, 0], sizes = [16, 128], strides = [1, 1]} : vector<128x128xf32> to vector<16x128xf32>
    %39 = vector.extract_strided_slice %6 {offsets = [48, 0], sizes = [16, 128], strides = [1, 1]} : vector<128x128xf32> to vector<16x128xf32>
    %40 = arith.select %25, %38, %39 : vector<16x128xi1>, vector<16x128xf32>
    %41 = vector.extract_strided_slice %6 {offsets = [80, 0], sizes = [16, 128], strides = [1, 1]} : vector<128x128xf32> to vector<16x128xf32>
    %42 = vector.extract_strided_slice %6 {offsets = [32, 0], sizes = [16, 128], strides = [1, 1]} : vector<128x128xf32> to vector<16x128xf32>
    %43 = arith.select %25, %41, %42 : vector<16x128xi1>, vector<16x128xf32>
    %44 = vector.extract_strided_slice %6 {offsets = [96, 0], sizes = [16, 128], strides = [1, 1]} : vector<128x128xf32> to vector<16x128xf32>
    %45 = vector.extract_strided_slice %6 {offsets = [16, 0], sizes = [16, 128], strides = [1, 1]} : vector<128x128xf32> to vector<16x128xf32>
    %46 = arith.select %25, %44, %45 : vector<16x128xi1>, vector<16x128xf32>
    %47 = vector.extract_strided_slice %6 {offsets = [112, 0], sizes = [16, 128], strides = [1, 1]} : vector<128x128xf32> to vector<16x128xf32>
    %48 = vector.extract_strided_slice %6 {offsets = [0, 0], sizes = [16, 128], strides = [1, 1]} : vector<128x128xf32> to vector<16x128xf32>
    %49 = arith.select %25, %47, %48 : vector<16x128xi1>, vector<16x128xf32>
    %c0_9 = arith.constant 0 : index
    %c0_10 = arith.constant 0 : index
    %50 = vector.load %arg4[%c0_9, %c0_10] : memref<32x128xf32, #tpu.memory_space<vmem>>, vector<32x128xf32>
    %cst_11 = arith.constant 0.000000e+00 : f32
    %51 = vector.broadcast %cst_11 : f32 to vector<16x32xf32>
    %cst_12 = arith.constant 0.000000e+00 : f32
    %52 = vector.broadcast %cst_12 : f32 to vector<16x32xf32>
    %cst_13 = arith.constant dense<0.000000e+00> : vector<16x128xf32>
    %53 = tpu.matmul %51, %50, %cst_13 {dimension_numbers = #tpu.dot_dimension_numbers<[1], [0], [0], [1], [0, 0, 1, 1], [], []>} : vector<16x32xf32>, vector<32x128xf32>, vector<16x128xf32> -> vector<16x128xf32>
    %54 = arith.addf %28, %53 : vector<16x128xf32>
    %55 = vector.extract_strided_slice %54 {offsets = [0, 0], sizes = [16, 96], strides = [1, 1]} : vector<16x128xf32> to vector<16x96xf32>
    %56 = arith.negf %55 : vector<16x96xf32>
    %57 = math.exp %56 : vector<16x96xf32>
    %cst_14 = arith.constant 1.000000e+00 : f32
    %58 = vector.broadcast %cst_14 : f32 to vector<16x96xf32>
    %59 = arith.addf %58, %57 : vector<16x96xf32>
    %60 = arith.divf %58, %59 : vector<16x96xf32>
    %61 = vector.extract_strided_slice %54 {offsets = [0, 96], sizes = [16, 32], strides = [1, 1]} : vector<16x128xf32> to vector<16x32xf32>
    %62 = math.tanh %61 : vector<16x32xf32>
    %63 = vector.extract_strided_slice %60 {offsets = [0, 0], sizes = [16, 32], strides = [1, 1]} : vector<16x96xf32> to vector<16x32xf32>
    %64 = vector.extract_strided_slice %60 {offsets = [0, 32], sizes = [16, 32], strides = [1, 1]} : vector<16x96xf32> to vector<16x32xf32>
    %65 = vector.extract_strided_slice %60 {offsets = [0, 64], sizes = [16, 32], strides = [1, 1]} : vector<16x96xf32> to vector<16x32xf32>
    %66 = arith.mulf %64, %52 : vector<16x32xf32>
    %67 = arith.mulf %63, %62 : vector<16x32xf32>
    %68 = arith.addf %66, %67 : vector<16x32xf32>
    %69 = math.tanh %68 : vector<16x32xf32>
    %70 = arith.mulf %65, %69 : vector<16x32xf32>
    %c0_15 = arith.constant 0 : index
    %c0_16 = arith.constant 0 : index
    %71 = vector.load %arg12[%c0_15, %c0_16] : memref<128x32xf32, #tpu.memory_space<vmem>>, vector<16x32xf32>
    tpu.vector_store %arg12[%c0_15, %c0_16], %70 {strides = array<i32>} : memref<128x32xf32, #tpu.memory_space<vmem>>, vector<16x32xf32>,
    %cst_17 = arith.constant dense<0.000000e+00> : vector<16x128xf32>
    %72 = tpu.matmul %70, %50, %cst_17 {dimension_numbers = #tpu.dot_dimension_numbers<[1], [0], [0], [1], [0, 0, 1, 1], [], []>} : vector<16x32xf32>, vector<32x128xf32>, vector<16x128xf32> -> vector<16x128xf32>
    %73 = arith.addf %31, %72 : vector<16x128xf32>
    %74 = vector.extract_strided_slice %73 {offsets = [0, 0], sizes = [16, 96], strides = [1, 1]} : vector<16x128xf32> to vector<16x96xf32>
    %75 = arith.negf %74 : vector<16x96xf32>
    %76 = math.exp %75 : vector<16x96xf32>
    %cst_18 = arith.constant 1.000000e+00 : f32
    %77 = vector.broadcast %cst_18 : f32 to vector<16x96xf32>
    %78 = arith.addf %77, %76 : vector<16x96xf32>
    %79 = arith.divf %77, %78 : vector<16x96xf32>
    %80 = vector.extract_strided_slice %73 {offsets = [0, 96], sizes = [16, 32], strides = [1, 1]} : vector<16x128xf32> to vector<16x32xf32>
    %81 = math.tanh %80 : vector<16x32xf32>
    %82 = vector.extract_strided_slice %79 {offsets = [0, 0], sizes = [16, 32], strides = [1, 1]} : vector<16x96xf32> to vector<16x32xf32>
    %83 = vector.extract_strided_slice %79 {offsets = [0, 32], sizes = [16, 32], strides = [1, 1]} : vector<16x96xf32> to vector<16x32xf32>
    %84 = vector.extract_strided_slice %79 {offsets = [0, 64], sizes = [16, 32], strides = [1, 1]} : vector<16x96xf32> to vector<16x32xf32>
    %85 = arith.mulf %83, %68 : vector<16x32xf32>
    %86 = arith.mulf %82, %81 : vector<16x32xf32>
    %87 = arith.addf %85, %86 : vector<16x32xf32>
    %88 = math.tanh %87 : vector<16x32xf32>
    %89 = arith.mulf %84, %88 : vector<16x32xf32>
    %c16 = arith.constant 16 : index
    %c0_19 = arith.constant 0 : index
    %90 = vector.load %arg12[%c16, %c0_19] : memref<128x32xf32, #tpu.memory_space<vmem>>, vector<16x32xf32>
    tpu.vector_store %arg12[%c16, %c0_19], %89 {strides = array<i32>} : memref<128x32xf32, #tpu.memory_space<vmem>>, vector<16x32xf32>,
    %cst_20 = arith.constant dense<0.000000e+00> : vector<16x128xf32>
    %91 = tpu.matmul %89, %50, %cst_20 {dimension_numbers = #tpu.dot_dimension_numbers<[1], [0], [0], [1], [0, 0, 1, 1], [], []>} : vector<16x32xf32>, vector<32x128xf32>, vector<16x128xf32> -> vector<16x128xf32>
    %92 = arith.addf %34, %91 : vector<16x128xf32>
    %93 = vector.extract_strided_slice %92 {offsets = [0, 0], sizes = [16, 96], strides = [1, 1]} : vector<16x128xf32> to vector<16x96xf32>
    %94 = arith.negf %93 : vector<16x96xf32>
    %95 = math.exp %94 : vector<16x96xf32>
    %cst_21 = arith.constant 1.000000e+00 : f32
    %96 = vector.broadcast %cst_21 : f32 to vector<16x96xf32>
    %97 = arith.addf %96, %95 : vector<16x96xf32>
    %98 = arith.divf %96, %97 : vector<16x96xf32>
    %99 = vector.extract_strided_slice %92 {offsets = [0, 96], sizes = [16, 32], strides = [1, 1]} : vector<16x128xf32> to vector<16x32xf32>
    %100 = math.tanh %99 : vector<16x32xf32>
    %101 = vector.extract_strided_slice %98 {offsets = [0, 0], sizes = [16, 32], strides = [1, 1]} : vector<16x96xf32> to vector<16x32xf32>
    %102 = vector.extract_strided_slice %98 {offsets = [0, 32], sizes = [16, 32], strides = [1, 1]} : vector<16x96xf32> to vector<16x32xf32>
    %103 = vector.extract_strided_slice %98 {offsets = [0, 64], sizes = [16, 32], strides = [1, 1]} : vector<16x96xf32> to vector<16x32xf32>
    %104 = arith.mulf %102, %87 : vector<16x32xf32>
    %105 = arith.mulf %101, %100 : vector<16x32xf32>
    %106 = arith.addf %104, %105 : vector<16x32xf32>
    %107 = math.tanh %106 : vector<16x32xf32>
    %108 = arith.mulf %103, %107 : vector<16x32xf32>
    %c32 = arith.constant 32 : index
    %c0_22 = arith.constant 0 : index
    %109 = vector.load %arg12[%c32, %c0_22] : memref<128x32xf32, #tpu.memory_space<vmem>>, vector<16x32xf32>
    tpu.vector_store %arg12[%c32, %c0_22], %108 {strides = array<i32>} : memref<128x32xf32, #tpu.memory_space<vmem>>, vector<16x32xf32>,
    %cst_23 = arith.constant dense<0.000000e+00> : vector<16x128xf32>
    %110 = tpu.matmul %108, %50, %cst_23 {dimension_numbers = #tpu.dot_dimension_numbers<[1], [0], [0], [1], [0, 0, 1, 1], [], []>} : vector<16x32xf32>, vector<32x128xf32>, vector<16x128xf32> -> vector<16x128xf32>
    %111 = arith.addf %37, %110 : vector<16x128xf32>
    %112 = vector.extract_strided_slice %111 {offsets = [0, 0], sizes = [16, 96], strides = [1, 1]} : vector<16x128xf32> to vector<16x96xf32>
    %113 = arith.negf %112 : vector<16x96xf32>
    %114 = math.exp %113 : vector<16x96xf32>
    %cst_24 = arith.constant 1.000000e+00 : f32
    %115 = vector.broadcast %cst_24 : f32 to vector<16x96xf32>
    %116 = arith.addf %115, %114 : vector<16x96xf32>
    %117 = arith.divf %115, %116 : vector<16x96xf32>
    %118 = vector.extract_strided_slice %111 {offsets = [0, 96], sizes = [16, 32], strides = [1, 1]} : vector<16x128xf32> to vector<16x32xf32>
    %119 = math.tanh %118 : vector<16x32xf32>
    %120 = vector.extract_strided_slice %117 {offsets = [0, 0], sizes = [16, 32], strides = [1, 1]} : vector<16x96xf32> to vector<16x32xf32>
    %121 = vector.extract_strided_slice %117 {offsets = [0, 32], sizes = [16, 32], strides = [1, 1]} : vector<16x96xf32> to vector<16x32xf32>
    %122 = vector.extract_strided_slice %117 {offsets = [0, 64], sizes = [16, 32], strides = [1, 1]} : vector<16x96xf32> to vector<16x32xf32>
    %123 = arith.mulf %121, %106 : vector<16x32xf32>
    %124 = arith.mulf %120, %119 : vector<16x32xf32>
    %125 = arith.addf %123, %124 : vector<16x32xf32>
    %126 = math.tanh %125 : vector<16x32xf32>
    %127 = arith.mulf %122, %126 : vector<16x32xf32>
    %c48 = arith.constant 48 : index
    %c0_25 = arith.constant 0 : index
    %128 = vector.load %arg12[%c48, %c0_25] : memref<128x32xf32, #tpu.memory_space<vmem>>, vector<16x32xf32>
    tpu.vector_store %arg12[%c48, %c0_25], %127 {strides = array<i32>} : memref<128x32xf32, #tpu.memory_space<vmem>>, vector<16x32xf32>,
    %cst_26 = arith.constant dense<0.000000e+00> : vector<16x128xf32>
    %129 = tpu.matmul %127, %50, %cst_26 {dimension_numbers = #tpu.dot_dimension_numbers<[1], [0], [0], [1], [0, 0, 1, 1], [], []>} : vector<16x32xf32>, vector<32x128xf32>, vector<16x128xf32> -> vector<16x128xf32>
    %130 = arith.addf %40, %129 : vector<16x128xf32>
    %131 = vector.extract_strided_slice %130 {offsets = [0, 0], sizes = [16, 96], strides = [1, 1]} : vector<16x128xf32> to vector<16x96xf32>
    %132 = arith.negf %131 : vector<16x96xf32>
    %133 = math.exp %132 : vector<16x96xf32>
    %cst_27 = arith.constant 1.000000e+00 : f32
    %134 = vector.broadcast %cst_27 : f32 to vector<16x96xf32>
    %135 = arith.addf %134, %133 : vector<16x96xf32>
    %136 = arith.divf %134, %135 : vector<16x96xf32>
    %137 = vector.extract_strided_slice %130 {offsets = [0, 96], sizes = [16, 32], strides = [1, 1]} : vector<16x128xf32> to vector<16x32xf32>
    %138 = math.tanh %137 : vector<16x32xf32>
    %139 = vector.extract_strided_slice %136 {offsets = [0, 0], sizes = [16, 32], strides = [1, 1]} : vector<16x96xf32> to vector<16x32xf32>
    %140 = vector.extract_strided_slice %136 {offsets = [0, 32], sizes = [16, 32], strides = [1, 1]} : vector<16x96xf32> to vector<16x32xf32>
    %141 = vector.extract_strided_slice %136 {offsets = [0, 64], sizes = [16, 32], strides = [1, 1]} : vector<16x96xf32> to vector<16x32xf32>
    %142 = arith.mulf %140, %125 : vector<16x32xf32>
    %143 = arith.mulf %139, %138 : vector<16x32xf32>
    %144 = arith.addf %142, %143 : vector<16x32xf32>
    %145 = math.tanh %144 : vector<16x32xf32>
    %146 = arith.mulf %141, %145 : vector<16x32xf32>
    %c64 = arith.constant 64 : index
    %c0_28 = arith.constant 0 : index
    %147 = vector.load %arg12[%c64, %c0_28] : memref<128x32xf32, #tpu.memory_space<vmem>>, vector<16x32xf32>
    tpu.vector_store %arg12[%c64, %c0_28], %146 {strides = array<i32>} : memref<128x32xf32, #tpu.memory_space<vmem>>, vector<16x32xf32>,
    %cst_29 = arith.constant dense<0.000000e+00> : vector<16x128xf32>
    %148 = tpu.matmul %146, %50, %cst_29 {dimension_numbers = #tpu.dot_dimension_numbers<[1], [0], [0], [1], [0, 0, 1, 1], [], []>} : vector<16x32xf32>, vector<32x128xf32>, vector<16x128xf32> -> vector<16x128xf32>
    %149 = arith.addf %43, %148 : vector<16x128xf32>
    %150 = vector.extract_strided_slice %149 {offsets = [0, 0], sizes = [16, 96], strides = [1, 1]} : vector<16x128xf32> to vector<16x96xf32>
    %151 = arith.negf %150 : vector<16x96xf32>
    %152 = math.exp %151 : vector<16x96xf32>
    %cst_30 = arith.constant 1.000000e+00 : f32
    %153 = vector.broadcast %cst_30 : f32 to vector<16x96xf32>
    %154 = arith.addf %153, %152 : vector<16x96xf32>
    %155 = arith.divf %153, %154 : vector<16x96xf32>
    %156 = vector.extract_strided_slice %149 {offsets = [0, 96], sizes = [16, 32], strides = [1, 1]} : vector<16x128xf32> to vector<16x32xf32>
    %157 = math.tanh %156 : vector<16x32xf32>
    %158 = vector.extract_strided_slice %155 {offsets = [0, 0], sizes = [16, 32], strides = [1, 1]} : vector<16x96xf32> to vector<16x32xf32>
    %159 = vector.extract_strided_slice %155 {offsets = [0, 32], sizes = [16, 32], strides = [1, 1]} : vector<16x96xf32> to vector<16x32xf32>
    %160 = vector.extract_strided_slice %155 {offsets = [0, 64], sizes = [16, 32], strides = [1, 1]} : vector<16x96xf32> to vector<16x32xf32>
    %161 = arith.mulf %159, %144 : vector<16x32xf32>
    %162 = arith.mulf %158, %157 : vector<16x32xf32>
    %163 = arith.addf %161, %162 : vector<16x32xf32>
    %164 = math.tanh %163 : vector<16x32xf32>
    %165 = arith.mulf %160, %164 : vector<16x32xf32>
    %c80 = arith.constant 80 : index
    %c0_31 = arith.constant 0 : index
    %166 = vector.load %arg12[%c80, %c0_31] : memref<128x32xf32, #tpu.memory_space<vmem>>, vector<16x32xf32>
    tpu.vector_store %arg12[%c80, %c0_31], %165 {strides = array<i32>} : memref<128x32xf32, #tpu.memory_space<vmem>>, vector<16x32xf32>,
    %cst_32 = arith.constant dense<0.000000e+00> : vector<16x128xf32>
    %167 = tpu.matmul %165, %50, %cst_32 {dimension_numbers = #tpu.dot_dimension_numbers<[1], [0], [0], [1], [0, 0, 1, 1], [], []>} : vector<16x32xf32>, vector<32x128xf32>, vector<16x128xf32> -> vector<16x128xf32>
    %168 = arith.addf %46, %167 : vector<16x128xf32>
    %169 = vector.extract_strided_slice %168 {offsets = [0, 0], sizes = [16, 96], strides = [1, 1]} : vector<16x128xf32> to vector<16x96xf32>
    %170 = arith.negf %169 : vector<16x96xf32>
    %171 = math.exp %170 : vector<16x96xf32>
    %cst_33 = arith.constant 1.000000e+00 : f32
    %172 = vector.broadcast %cst_33 : f32 to vector<16x96xf32>
    %173 = arith.addf %172, %171 : vector<16x96xf32>
    %174 = arith.divf %172, %173 : vector<16x96xf32>
    %175 = vector.extract_strided_slice %168 {offsets = [0, 96], sizes = [16, 32], strides = [1, 1]} : vector<16x128xf32> to vector<16x32xf32>
    %176 = math.tanh %175 : vector<16x32xf32>
    %177 = vector.extract_strided_slice %174 {offsets = [0, 0], sizes = [16, 32], strides = [1, 1]} : vector<16x96xf32> to vector<16x32xf32>
    %178 = vector.extract_strided_slice %174 {offsets = [0, 32], sizes = [16, 32], strides = [1, 1]} : vector<16x96xf32> to vector<16x32xf32>
    %179 = vector.extract_strided_slice %174 {offsets = [0, 64], sizes = [16, 32], strides = [1, 1]} : vector<16x96xf32> to vector<16x32xf32>
    %180 = arith.mulf %178, %163 : vector<16x32xf32>
    %181 = arith.mulf %177, %176 : vector<16x32xf32>
    %182 = arith.addf %180, %181 : vector<16x32xf32>
    %183 = math.tanh %182 : vector<16x32xf32>
    %184 = arith.mulf %179, %183 : vector<16x32xf32>
    %c96 = arith.constant 96 : index
    %c0_34 = arith.constant 0 : index
    %185 = vector.load %arg12[%c96, %c0_34] : memref<128x32xf32, #tpu.memory_space<vmem>>, vector<16x32xf32>
    tpu.vector_store %arg12[%c96, %c0_34], %184 {strides = array<i32>} : memref<128x32xf32, #tpu.memory_space<vmem>>, vector<16x32xf32>,
    %cst_35 = arith.constant dense<0.000000e+00> : vector<16x128xf32>
    %186 = tpu.matmul %184, %50, %cst_35 {dimension_numbers = #tpu.dot_dimension_numbers<[1], [0], [0], [1], [0, 0, 1, 1], [], []>} : vector<16x32xf32>, vector<32x128xf32>, vector<16x128xf32> -> vector<16x128xf32>
    %187 = arith.addf %49, %186 : vector<16x128xf32>
    %188 = vector.extract_strided_slice %187 {offsets = [0, 0], sizes = [16, 96], strides = [1, 1]} : vector<16x128xf32> to vector<16x96xf32>
    %189 = arith.negf %188 : vector<16x96xf32>
    %190 = math.exp %189 : vector<16x96xf32>
    %cst_36 = arith.constant 1.000000e+00 : f32
    %191 = vector.broadcast %cst_36 : f32 to vector<16x96xf32>
    %192 = arith.addf %191, %190 : vector<16x96xf32>
    %193 = arith.divf %191, %192 : vector<16x96xf32>
    %194 = vector.extract_strided_slice %187 {offsets = [0, 96], sizes = [16, 32], strides = [1, 1]} : vector<16x128xf32> to vector<16x32xf32>
    %195 = math.tanh %194 : vector<16x32xf32>
    %196 = vector.extract_strided_slice %193 {offsets = [0, 0], sizes = [16, 32], strides = [1, 1]} : vector<16x96xf32> to vector<16x32xf32>
    %197 = vector.extract_strided_slice %193 {offsets = [0, 32], sizes = [16, 32], strides = [1, 1]} : vector<16x96xf32> to vector<16x32xf32>
    %198 = vector.extract_strided_slice %193 {offsets = [0, 64], sizes = [16, 32], strides = [1, 1]} : vector<16x96xf32> to vector<16x32xf32>
    %199 = arith.mulf %197, %182 : vector<16x32xf32>
    %200 = arith.mulf %196, %195 : vector<16x32xf32>
    %201 = arith.addf %199, %200 : vector<16x32xf32>
    %202 = math.tanh %201 : vector<16x32xf32>
    %203 = arith.mulf %198, %202 : vector<16x32xf32>
    %c112 = arith.constant 112 : index
    %c0_37 = arith.constant 0 : index
    %204 = vector.load %arg12[%c112, %c0_37] : memref<128x32xf32, #tpu.memory_space<vmem>>, vector<16x32xf32>
    tpu.vector_store %arg12[%c112, %c0_37], %203 {strides = array<i32>} : memref<128x32xf32, #tpu.memory_space<vmem>>, vector<16x32xf32>,
    %c0_38 = arith.constant 0 : index
    %c0_39 = arith.constant 0 : index
    %205 = vector.load %arg5[%c0_38, %c0_39] : memref<16x32xf32, #tpu.memory_space<vmem>>, vector<16x32xf32>
    %c0_40 = arith.constant 0 : index
    %c0_41 = arith.constant 0 : index
    %206 = vector.load %arg6[%c0_40, %c0_41] : memref<16x32xf32, #tpu.memory_space<vmem>>, vector<16x32xf32>
    %c0_42 = arith.constant 0 : index
    %c0_43 = arith.constant 0 : index
    %207 = vector.load %arg7[%c0_42, %c0_43] : memref<32x32xf32, #tpu.memory_space<vmem>>, vector<32x32xf32>
    %c0_44 = arith.constant 0 : index
    %c0_45 = arith.constant 0 : index
    %208 = vector.load %arg8[%c0_44, %c0_45] : memref<1x32xf32, #tpu.memory_space<vmem>>, vector<1x32xf32>
    %c0_46 = arith.constant 0 : index
    %c0_47 = arith.constant 0 : index
    %209 = vector.load %arg12[%c0_46, %c0_47] : memref<128x32xf32, #tpu.memory_space<vmem>>, vector<128x32xf32>
    %c112_48 = arith.constant 112 : index
    %c0_49 = arith.constant 0 : index
    %210 = vector.load %arg12[%c112_48, %c0_49] : memref<128x32xf32, #tpu.memory_space<vmem>>, vector<16x32xf32>
    %c96_50 = arith.constant 96 : index
    %c0_51 = arith.constant 0 : index
    %211 = vector.load %arg12[%c96_50, %c0_51] : memref<128x32xf32, #tpu.memory_space<vmem>>, vector<16x32xf32>
    %c80_52 = arith.constant 80 : index
    %c0_53 = arith.constant 0 : index
    %212 = vector.load %arg12[%c80_52, %c0_53] : memref<128x32xf32, #tpu.memory_space<vmem>>, vector<16x32xf32>
    %c64_54 = arith.constant 64 : index
    %c0_55 = arith.constant 0 : index
    %213 = vector.load %arg12[%c64_54, %c0_55] : memref<128x32xf32, #tpu.memory_space<vmem>>, vector<16x32xf32>
    %c48_56 = arith.constant 48 : index
    %c0_57 = arith.constant 0 : index
    %214 = vector.load %arg12[%c48_56, %c0_57] : memref<128x32xf32, #tpu.memory_space<vmem>>, vector<16x32xf32>
    %c32_58 = arith.constant 32 : index
    %c0_59 = arith.constant 0 : index
    %215 = vector.load %arg12[%c32_58, %c0_59] : memref<128x32xf32, #tpu.memory_space<vmem>>, vector<16x32xf32>
    %c16_60 = arith.constant 16 : index
    %c0_61 = arith.constant 0 : index
    %216 = vector.load %arg12[%c16_60, %c0_61] : memref<128x32xf32, #tpu.memory_space<vmem>>, vector<16x32xf32>
    %c0_62 = arith.constant 0 : index
    %c0_63 = arith.constant 0 : index
    %217 = vector.load %arg12[%c0_62, %c0_63] : memref<128x32xf32, #tpu.memory_space<vmem>>, vector<16x32xf32>
    %218 = tpu.concatenate %210, %211, %212, %213, %214, %215, %216, %217 in 0 : vector<16x32xf32>, vector<16x32xf32>, vector<16x32xf32>, vector<16x32xf32>, vector<16x32xf32>, vector<16x32xf32>, vector<16x32xf32>, vector<16x32xf32> -> vector<128x32xf32>
    %219 = vector.extract_strided_slice %209 {offsets = [0, 0], sizes = [128, 16], strides = [1, 1]} : vector<128x32xf32> to vector<128x16xf32>
    %cst_64 = arith.constant dense<0.000000e+00> : vector<128x32xf32>
    %220 = tpu.matmul %219, %205, %cst_64 {dimension_numbers = #tpu.dot_dimension_numbers<[1], [0], [0], [1], [0, 0, 1, 1], [], []>} : vector<128x16xf32>, vector<16x32xf32>, vector<128x32xf32> -> vector<128x32xf32>
    %221 = vector.extract_strided_slice %218 {offsets = [0, 16], sizes = [128, 16], strides = [1, 1]} : vector<128x32xf32> to vector<128x16xf32>
    %cst_65 = arith.constant dense<0.000000e+00> : vector<128x32xf32>
    %222 = tpu.matmul %221, %206, %cst_65 {dimension_numbers = #tpu.dot_dimension_numbers<[1], [0], [0], [1], [0, 0, 1, 1], [], []>} : vector<128x16xf32>, vector<16x32xf32>, vector<128x32xf32> -> vector<128x32xf32>
    %223 = arith.addf %220, %222 : vector<128x32xf32>
    %cst_66 = arith.constant dense<0.000000e+00> : vector<128x32xf32>
    %224 = tpu.matmul %1, %207, %cst_66 {dimension_numbers = #tpu.dot_dimension_numbers<[1], [0], [0], [1], [0, 0, 1, 1], [], []>} : vector<128x32xf32>, vector<32x32xf32>, vector<128x32xf32> -> vector<128x32xf32>
    %225 = arith.addf %223, %224 : vector<128x32xf32>
    %226 = vector.broadcast %208 : vector<1x32xf32> to vector<128x32xf32>
    %227 = arith.addf %225, %226 : vector<128x32xf32>
    %228 = math.tanh %227 : vector<128x32xf32>
    %229 = vector.shape_cast %228 : vector<128x32xf32> to vector<8x16x32xf32>
    %cst_67 = arith.constant dense<0xFF800000> : vector<16x32xf32>
    %230 = vector.multi_reduction <maximumf>, %229, %cst_67 [0] : vector<8x16x32xf32> to vector<16x32xf32>
    %c0_68 = arith.constant 0 : index
    %c0_69 = arith.constant 0 : index
    %231 = vector.load %arg9[%c0_68, %c0_69] : memref<32x2xf32, #tpu.memory_space<vmem>>, vector<32x2xf32>
    %cst_70 = arith.constant dense<0.000000e+00> : vector<16x2xf32>
    %232 = tpu.matmul %230, %231, %cst_70 {dimension_numbers = #tpu.dot_dimension_numbers<[1], [0], [0], [1], [0, 0, 1, 1], [], []>} : vector<16x32xf32>, vector<32x2xf32>, vector<16x2xf32> -> vector<16x2xf32>
    %c0_71 = arith.constant 0 : index
    %c0_72 = arith.constant 0 : index
    %233 = vector.load %arg10[%c0_71, %c0_72] : memref<1x2xf32, #tpu.memory_space<vmem>>, vector<1x2xf32>
    %234 = vector.broadcast %233 : vector<1x2xf32> to vector<16x2xf32>
    %235 = arith.addf %232, %234 : vector<16x2xf32>
    %236 = arith.negf %235 : vector<16x2xf32>
    %237 = math.exp %236 : vector<16x2xf32>
    %cst_73 = arith.constant 1.000000e+00 : f32
    %238 = vector.broadcast %cst_73 : f32 to vector<16x2xf32>
    %239 = arith.addf %238, %237 : vector<16x2xf32>
    %240 = arith.divf %238, %239 : vector<16x2xf32>
    %c0_74 = arith.constant 0 : index
    %c0_75 = arith.constant 0 : index
    %241 = vector.load %arg11[%c0_74, %c0_75] : memref<16x2xf32, #tpu.memory_space<vmem>>, vector<16x2xf32>
    tpu.vector_store %arg11[%c0_74, %c0_75], %240 {strides = array<i32>} : memref<16x2xf32, #tpu.memory_space<vmem>>, vector<16x2xf32>,
    return
  }
  func.func @transform_0(%arg0: i32) -> (i32, i32, i32) {
    %c0_i32 = arith.constant 0 : i32
    %c0_i32_0 = arith.constant 0 : i32
    %c0_i32_1 = arith.constant 0 : i32
    return %c0_i32, %arg0, %c0_i32_0 : i32, i32, i32
  }
  func.func @transform_1(%arg0: i32) -> (i32, i32) {
    %c0_i32 = arith.constant 0 : i32
    %c0_i32_0 = arith.constant 0 : i32
    %c0_i32_1 = arith.constant 0 : i32
    return %c0_i32, %c0_i32_0 : i32, i32
  }
  func.func @transform_2(%arg0: i32) -> (i32, i32) {
    %c0_i32 = arith.constant 0 : i32
    %c0_i32_0 = arith.constant 0 : i32
    %c0_i32_1 = arith.constant 0 : i32
    return %c0_i32, %c0_i32_0 : i32, i32
  }
  func.func @transform_3(%arg0: i32) -> (i32, i32) {
    %c0_i32 = arith.constant 0 : i32
    %c0_i32_0 = arith.constant 0 : i32
    %c0_i32_1 = arith.constant 0 : i32
    return %c0_i32, %c0_i32_0 : i32, i32
  }
  func.func @transform_4(%arg0: i32) -> (i32, i32) {
    %c0_i32 = arith.constant 0 : i32
    %c0_i32_0 = arith.constant 0 : i32
    %c0_i32_1 = arith.constant 0 : i32
    return %c0_i32, %c0_i32_0 : i32, i32
  }
  func.func @transform_5(%arg0: i32) -> (i32, i32) {
    %c0_i32 = arith.constant 0 : i32
    %c0_i32_0 = arith.constant 0 : i32
    %c0_i32_1 = arith.constant 0 : i32
    return %c0_i32, %c0_i32_0 : i32, i32
  }
  func.func @transform_6(%arg0: i32) -> (i32, i32) {
    %c0_i32 = arith.constant 0 : i32
    %c0_i32_0 = arith.constant 0 : i32
    %c0_i32_1 = arith.constant 0 : i32
    return %c0_i32, %c0_i32_0 : i32, i32
  }
  func.func @transform_7(%arg0: i32) -> (i32, i32) {
    %c0_i32 = arith.constant 0 : i32
    %c0_i32_0 = arith.constant 0 : i32
    %c0_i32_1 = arith.constant 0 : i32
    return %c0_i32, %c0_i32_0 : i32, i32
  }
  func.func @transform_8(%arg0: i32) -> (i32, i32) {
    %c0_i32 = arith.constant 0 : i32
    %c0_i32_0 = arith.constant 0 : i32
    %c0_i32_1 = arith.constant 0 : i32
    return %c0_i32, %c0_i32_0 : i32, i32
  }
  func.func @transform_9(%arg0: i32) -> (i32, i32) {
    %c0_i32 = arith.constant 0 : i32
    %c0_i32_0 = arith.constant 0 : i32
    %c0_i32_1 = arith.constant 0 : i32
    return %c0_i32, %c0_i32_0 : i32, i32
  }
  func.func @transform_10(%arg0: i32) -> (i32, i32) {
    %c0_i32 = arith.constant 0 : i32
    %c0_i32_0 = arith.constant 0 : i32
    return %arg0, %c0_i32 : i32, i32
  }
}

</mosaic_0001>

<llo_original>
// kernel: tpu_custom_call.1
$region0: #{tpu_custom_call.1}
  #allocation0 [shape = 'u32[]', space=smem, size = 0x4, offset = 0x4, fixed_abs, tag = 'smem constant byte address 0x4 - core index']
  #allocation1 [shape = 'u32[144,128]{1,0:T(1,128)}', space=vmem, size = 0x12000, scoped, tag = 'internal scratch']
  #allocation2 [shape = 'f32[128,32]{1,0:T(8,128)}', space=vmem, size = 0x10000, scoped, tag = 'scratch operand']
  %s0 = inlined_call_operand.hbm [shape: f32[8,16,32], index: 0, kind: input, shape index: {}]
  %s1 = inlined_call_operand.vmem [shape: f32[32,128], index: 1, kind: input, shape index: {}]
  %s2 = inlined_call_operand.vmem [shape: f32[1,128], index: 2, kind: input, shape index: {}]
  %s3 = inlined_call_operand.hbm [shape: f32[32,128], index: 3, kind: input, shape index: {}]
  %s4 = inlined_call_operand.hbm [shape: f32[16,32], index: 4, kind: input, shape index: {}]
  %s5 = inlined_call_operand.hbm [shape: f32[16,32], index: 5, kind: input, shape index: {}]
  %s6 = inlined_call_operand.hbm [shape: f32[32,32], index: 6, kind: input, shape index: {}]
  %s7 = inlined_call_operand.vmem [shape: f32[1,32], index: 7, kind: input, shape index: {}]
  %s8 = inlined_call_operand.vmem [shape: f32[32,2], index: 8, kind: input, shape index: {}]
  %s9 = inlined_call_operand.vmem [shape: f32[1,2], index: 9, kind: input, shape index: {}]
  %s10 = inlined_call_operand.vmem [shape: f32[16,2], index: 10, kind: output, shape index: {}]
  %s11 = sld [smem:[#allocation0]]
  $region70: #{tpu_custom_call.1} parent=0
    _
  %s13 = ssub.s32 1, %s11
  %s14 = scalar_select 0, %s13, %s11
  $region1: #{tpu_custom_call.1} parent=0
    #allocation3 [shape = 'u8[65536]{0}', space=vmem, size = 0x10000, scoped, tag = 'input window, operand 0, single buffered']
    #allocation4 [shape = 's32[1]{0}', space=sflag, size = 0x4, scoped, tag = 'scoped memory for tpu_custom_call.1']
    #allocation5 [shape = 'u8[16384]{0}', space=vmem, size = 0x4000, scoped, tag = 'input window, operand 3, single buffered']
    #allocation6 [shape = 's32[1]{0}', space=sflag, size = 0x4, scoped, tag = 'scoped memory for tpu_custom_call.1']
    #allocation7 [shape = 'u8[8192]{0}', space=vmem, size = 0x2000, scoped, tag = 'input window, operand 4, single buffered']
    #allocation8 [shape = 'u8[8192]{0}', space=vmem, size = 0x2000, scoped, tag = 'input window, operand 5, single buffered']
    #allocation9 [shape = 's32[1]{0}', space=sflag, size = 0x4, scoped, tag = 'scoped memory for tpu_custom_call.1']
    #allocation10 [shape = 'u8[16384]{0}', space=vmem, size = 0x4000, scoped, tag = 'input window, operand 6, single buffered']
    %15 = vsyncpa [#allocation4], 0
    %16 = vsyncpa [#allocation6], 0
    %17 = vsyncpa [#allocation9], 0
    // Predicated region
    $region2: #{tpu_custom_call.1} parent=1 // pred_check
      _
    $region3: #{tpu_custom_call.1} parent=1 // pred_check_branch
      %19 = sbr.rel (0) target = $region5
    $region4: #{tpu_custom_call.1} parent=1 // pred_region
      %s21 = ssub.s32 2048, 2048
      %22 = vsyncadd [#allocation4], %s21
      %s23 = sshll.u32 [#allocation3], 4
      %s24 = int_to_ptr.vmem [resolvable:$true] %s23
      %29 = dma.hbm_to_vmem [thread:$0]  %s0, 2048, %s24, [#allocation4], 128, 128, 8
    $region5: #{tpu_custom_call.1} parent=1 // pred_fallthru
      _
    // Predicated region
    $region6: #{tpu_custom_call.1} parent=1 // pred_check
      _
    $region7: #{tpu_custom_call.1} parent=1 // pred_check_branch
      %31 = sbr.rel (0) target = $region9
    $region8: #{tpu_custom_call.1} parent=1 // pred_region
      _
    $region9: #{tpu_custom_call.1} parent=1 // pred_fallthru
      _
    // Predicated region
    $region10: #{tpu_custom_call.1} parent=1 // pred_check
      _
    $region11: #{tpu_custom_call.1} parent=1 // pred_check_branch
      %33 = sbr.rel (0) target = $region13
    $region12: #{tpu_custom_call.1} parent=1 // pred_region
      _
    $region13: #{tpu_custom_call.1} parent=1 // pred_fallthru
      _
    // Predicated region
    $region14: #{tpu_custom_call.1} parent=1 // pred_check
      _
    $region15: #{tpu_custom_call.1} parent=1 // pred_check_branch
      %35 = sbr.rel (0) target = $region17
    $region16: #{tpu_custom_call.1} parent=1 // pred_region
      %s37 = ssub.s32 512, 512
      %38 = vsyncadd [#allocation6], %s37
      %s39 = sshll.u32 [#allocation5], 4
      %s40 = int_to_ptr.vmem [resolvable:$true] %s39
      %45 = dma.hbm_to_vmem [thread:$0]  %s3, 512, %s40, [#allocation6], 128, 128, 8
    $region17: #{tpu_custom_call.1} parent=1 // pred_fallthru
      _
    // Predicated region
    $region18: #{tpu_custom_call.1} parent=1 // pred_check
      _
    $region19: #{tpu_custom_call.1} parent=1 // pred_check_branch
      %47 = sbr.rel (0) target = $region21
    $region20: #{tpu_custom_call.1} parent=1 // pred_region
      %s49 = ssub.s32 256, 256
      %50 = vsyncadd [#allocation6], %s49
      %s51 = sshll.u32 [#allocation7], 4
      %s52 = int_to_ptr.vmem [resolvable:$true] %s51
      %57 = dma.hbm_to_vmem [thread:$0]  %s4, 256, %s52, [#allocation6], 128, 128, 8
    $region21: #{tpu_custom_call.1} parent=1 // pred_fallthru
      _
    // Predicated region
    $region22: #{tpu_custom_call.1} parent=1 // pred_check
      _
    $region23: #{tpu_custom_call.1} parent=1 // pred_check_branch
      %59 = sbr.rel (0) target = $region25
    $region24: #{tpu_custom_call.1} parent=1 // pred_region
      %s61 = ssub.s32 256, 256
      %62 = vsyncadd [#allocation9], %s61
      %s63 = sshll.u32 [#allocation8], 4
      %s64 = int_to_ptr.vmem [resolvable:$true] %s63
      %69 = dma.hbm_to_vmem [thread:$0]  %s5, 256, %s64, [#allocation9], 128, 128, 8
    $region25: #{tpu_custom_call.1} parent=1 // pred_fallthru
      _
    // Predicated region
    $region26: #{tpu_custom_call.1} parent=1 // pred_check
      _
    $region27: #{tpu_custom_call.1} parent=1 // pred_check_branch
      %71 = sbr.rel (0) target = $region29
    $region28: #{tpu_custom_call.1} parent=1 // pred_region
      %s73 = ssub.s32 512, 512
      %74 = vsyncadd [#allocation9], %s73
      %s75 = sshll.u32 [#allocation10], 4
      %s76 = int_to_ptr.vmem [resolvable:$true] %s75
      %81 = dma.hbm_to_vmem [thread:$0]  %s6, 512, %s76, [#allocation9], 128, 128, 8
    $region29: #{tpu_custom_call.1} parent=1 // pred_fallthru
      _
    // Predicated region
    $region30: #{tpu_custom_call.1} parent=1 // pred_check
      _
    $region31: #{tpu_custom_call.1} parent=1 // pred_check_branch
      %83 = sbr.rel (0) target = $region33
    $region32: #{tpu_custom_call.1} parent=1 // pred_region
      _
    $region33: #{tpu_custom_call.1} parent=1 // pred_fallthru
      _
    // Predicated region
    $region34: #{tpu_custom_call.1} parent=1 // pred_check
      _
    $region35: #{tpu_custom_call.1} parent=1 // pred_check_branch
      %85 = sbr.rel (0) target = $region37
    $region36: #{tpu_custom_call.1} parent=1 // pred_region
      _
    $region37: #{tpu_custom_call.1} parent=1 // pred_fallthru
      _
    // Predicated region
    $region38: #{tpu_custom_call.1} parent=1 // pred_check
      _
    $region39: #{tpu_custom_call.1} parent=1 // pred_check_branch
      %87 = sbr.rel (0) target = $region41
    $region40: #{tpu_custom_call.1} parent=1 // pred_region
      _
    $region41: #{tpu_custom_call.1} parent=1 // pred_fallthru
      _
    // Predicated region
    $region42: #{tpu_custom_call.1} parent=1 // pred_check
      _
    $region43: #{tpu_custom_call.1} parent=1 // pred_check_branch
      %89 = sbr.rel (0) target = $region45
    $region44: #{tpu_custom_call.1} parent=1 // pred_region
      %90 = dma.done [#allocation4], 2048
    $region45: #{tpu_custom_call.1} parent=1 // pred_fallthru
      _
    // Predicated region
    $region46: #{tpu_custom_call.1} parent=1 // pred_check
      _
    $region47: #{tpu_custom_call.1} parent=1 // pred_check_branch
      %92 = sbr.rel (0) target = $region49
    $region48: #{tpu_custom_call.1} parent=1 // pred_region
      %93 = dma.done [#allocation6], 512
    $region49: #{tpu_custom_call.1} parent=1 // pred_fallthru
      _
    // Predicated region
    $region50: #{tpu_custom_call.1} parent=1 // pred_check
      _
    $region51: #{tpu_custom_call.1} parent=1 // pred_check_branch
      %95 = sbr.rel (0) target = $region53
    $region52: #{tpu_custom_call.1} parent=1 // pred_region
      %96 = dma.done [#allocation6], 256
    $region53: #{tpu_custom_call.1} parent=1 // pred_fallthru
      _
    // Predicated region
    $region54: #{tpu_custom_call.1} parent=1 // pred_check
      _
    $region55: #{tpu_custom_call.1} parent=1 // pred_check_branch
      %98 = sbr.rel (0) target = $region57
    $region56: #{tpu_custom_call.1} parent=1 // pred_region
      %99 = dma.done [#allocation9], 256
    $region57: #{tpu_custom_call.1} parent=1 // pred_fallthru
      _
    // Predicated region
    $region58: #{tpu_custom_call.1} parent=1 // pred_check
      _
    $region59: #{tpu_custom_call.1} parent=1 // pred_check_branch
      %101 = sbr.rel (0) target = $region61
    $region60: #{tpu_custom_call.1} parent=1 // pred_region
      %102 = dma.done [#allocation9], 512
    $region61: #{tpu_custom_call.1} parent=1 // pred_fallthru
      _
    %v103 = vld [vmem:[#allocation3] sm:$0xff]
    %v104 = vld [vmem:[#allocation3 + $0x8] sm:$0xff]
    %v105 = vld [vmem:[#allocation3 + $0x10] sm:$0xff]
    %v106 = vld [vmem:[#allocation3 + $0x18] sm:$0xff]
    %v107 = vld [vmem:[#allocation3 + $0x20] sm:$0xff]
    %v108 = vld [vmem:[#allocation3 + $0x28] sm:$0xff]
    %v109 = vld [vmem:[#allocation3 + $0x30] sm:$0xff]
    %v110 = vld [vmem:[#allocation3 + $0x38] sm:$0xff]
    %v111 = vld [vmem:[#allocation3 + $0x40] sm:$0xff]
    %v112 = vld [vmem:[#allocation3 + $0x48] sm:$0xff]
    %v113 = vld [vmem:[#allocation3 + $0x50] sm:$0xff]
    %v114 = vld [vmem:[#allocation3 + $0x58] sm:$0xff]
    %v115 = vld [vmem:[#allocation3 + $0x60] sm:$0xff]
    %v116 = vld [vmem:[#allocation3 + $0x68] sm:$0xff]
    %v117 = vld [vmem:[#allocation3 + $0x70] sm:$0xff]
    %v118 = vld [vmem:[#allocation3 + $0x78] sm:$0xff]
    %v119 = vld [vmem:[%s1] sm:$0xff]
    %v120 = vld [vmem:[%s1 + $0x8] sm:$0xff]
    %v121 = vld [vmem:[%s1 + $0x10] sm:$0xff]
    %v122 = vld [vmem:[%s1 + $0x18] sm:$0xff]
    %v123 = vld [vmem:[%s2] sm:$0x1]
    %v125 = vlaneseq
    %v126 = vshrl.u32 %v125, 7
    %v127 = vsub.s32 0, %v126
    %v128 = vrot.slane %v123, %v127
    %vm130 = vcmask 261120
    %v132 = vsel %vm130, %v103, 0
    %v135 = vsel %vm130, %v104, 0
    %v138 = vsel %vm130, %v105, 0
    %v141 = vsel %vm130, %v106, 0
    %v144 = vsel %vm130, %v107, 0
    %v147 = vsel %vm130, %v108, 0
    %v150 = vsel %vm130, %v109, 0
    %v153 = vsel %vm130, %v110, 0
    %v156 = vsel %vm130, %v111, 0
    %v159 = vsel %vm130, %v112, 0
    %v162 = vsel %vm130, %v113, 0
    %v165 = vsel %vm130, %v114, 0
    %v168 = vsel %vm130, %v115, 0
    %v171 = vsel %vm130, %v116, 0
    %v174 = vsel %vm130, %v117, 0
    %v177 = vsel %vm130, %v118, 0
    %179 = vmatprep.subr.mxu0 0.0
    %180 = vmatpush1.msra.mxu0 0.0
    %181 = vmatprep.subr.mxu0 0.0
    %182 = vmatpush1.msra.mxu0 0.0
    %183 = vmatprep.subr.mxu0 0.0
    %184 = vmatpush1.msra.mxu0 0.0
    %185 = vmatprep.subr.mxu0 0.0
    %186 = vmatpush1.msra.mxu0 0.0
    %187 = vmatprep.subr.mxu0 0.0
    %188 = vmatpush1.msra.mxu0 0.0
    %189 = vmatprep.subr.mxu0 0.0
    %190 = vmatpush1.msra.mxu0 0.0
    %191 = vmatprep.subr.mxu0 0.0
    %192 = vmatpush1.msra.mxu0 0.0
    %193 = vmatprep.subr.mxu0 0.0
    %194 = vmatpush1.msra.mxu0 0.0
    %195 = vmatprep.subr.mxu0 0.0
    %196 = vmatpush1.msra.mxu0 0.0
    %197 = vmatprep.subr.mxu0 0.0
    %198 = vmatpush1.msra.mxu0 0.0
    %199 = vmatprep.subr.mxu0 0.0
    %200 = vmatpush1.msra.mxu0 0.0
    %201 = vmatprep.subr.mxu0 0.0
    %202 = vmatpush1.msra.mxu0 0.0
    %203 = vmatprep.subr.mxu0 0.0
    %204 = vmatpush1.msra.mxu0 %v122
    %205 = vmatprep.subr.mxu0 0.0
    %206 = vmatpush1.msra.mxu0 %v121
    %207 = vmatprep.subr.mxu0 0.0
    %208 = vmatpush1.msra.mxu0 %v120
    %209 = vmatprep.subr.mxu0 0.0
    %210 = vmatpush1.msra.mxu0 %v119
    %211 = vmatprep.subr.mxu0 0.0
    %212 = vmatpush2.msra.mxu0 0.0
    %213 = vmatprep.subr.mxu0 0.0
    %214 = vmatpush2.msra.mxu0 0.0
    %215 = vmatprep.subr.mxu0 0.0
    %216 = vmatpush2.msra.mxu0 0.0
    %217 = vmatprep.subr.mxu0 0.0
    %218 = vmatpush2.msra.mxu0 0.0
    %219 = vmatprep.subr.mxu0 0.0
    %220 = vmatpush2.msra.mxu0 0.0
    %221 = vmatprep.subr.mxu0 0.0
    %222 = vmatpush2.msra.mxu0 0.0
    %223 = vmatprep.subr.mxu0 0.0
    %224 = vmatpush2.msra.mxu0 0.0
    %225 = vmatprep.subr.mxu0 0.0
    %226 = vmatpush2.msra.mxu0 0.0
    %227 = vmatprep.subr.mxu0 0.0
    %228 = vmatpush2.msra.mxu0 0.0
    %229 = vmatprep.subr.mxu0 0.0
    %230 = vmatpush2.msra.mxu0 0.0
    %231 = vmatprep.subr.mxu0 0.0
    %232 = vmatpush2.msra.mxu0 0.0
    %233 = vmatprep.subr.mxu0 0.0
    %234 = vmatpush2.msra.mxu0 0.0
    %235 = vmatprep.subr.mxu0 0.0
    %236 = vmatpush2.msra.mxu0 0.0
    %237 = vmatprep.subr.mxu0 0.0
    %238 = vmatpush2.msra.mxu0 0.0
    %239 = vmatprep.subr.mxu0 0.0
    %240 = vmatpush2.msra.mxu0 0.0
    %241 = vmatprep.subr.mxu0 0.0
    %242 = vmatpush2.msra.mxu0 0.0
    %243 = vmatprep.mubr.f32.mxu0 0.0
    %244 = vmatmul.mubr.f32.gmra.mxu0 %v132
    %v245 = vpop.f32.mrf.mxu0
    %v246 = vadd.f32 %v128, %v245
    %v247 = vpop.f32.mrf.mxu0
    %248 = vmatprep.mubr.f32.mxu0 0.0
    %249 = vmatmul.mubr.f32.gmra.mxu0 %v135
    %v250 = vpop.f32.mrf.mxu0
    %v251 = vadd.f32 %v128, %v250
    %v252 = vpop.f32.mrf.mxu0
    %253 = vmatprep.mubr.f32.mxu0 0.0
    %254 = vmatmul.mubr.f32.gmra.mxu0 %v138
    %v255 = vpop.f32.mrf.mxu0
    %v256 = vadd.f32 %v128, %v255
    %v257 = vpop.f32.mrf.mxu0
    %258 = vmatprep.mubr.f32.mxu0 0.0
    %259 = vmatmul.mubr.f32.gmra.mxu0 %v141
    %v260 = vpop.f32.mrf.mxu0
    %v261 = vadd.f32 %v128, %v260
    %v262 = vpop.f32.mrf.mxu0
    %263 = vmatprep.mubr.f32.mxu0 0.0
    %264 = vmatmul.mubr.f32.gmra.mxu0 %v144
    %v265 = vpop.f32.mrf.mxu0
    %v266 = vadd.f32 %v128, %v265
    %v267 = vpop.f32.mrf.mxu0
    %268 = vmatprep.mubr.f32.mxu0 0.0
    %269 = vmatmul.mubr.f32.gmra.mxu0 %v147
    %v270 = vpop.f32.mrf.mxu0
    %v271 = vadd.f32 %v128, %v270
    %v272 = vpop.f32.mrf.mxu0
    %273 = vmatprep.mubr.f32.mxu0 0.0
    %274 = vmatmul.mubr.f32.gmra.mxu0 %v150
    %v275 = vpop.f32.mrf.mxu0
    %v276 = vadd.f32 %v128, %v275
    %v277 = vpop.f32.mrf.mxu0
    %278 = vmatprep.mubr.f32.mxu0 0.0
    %279 = vmatmul.mubr.f32.gmra.mxu0 %v153
    %v280 = vpop.f32.mrf.mxu0
    %v281 = vadd.f32 %v128, %v280
    %v282 = vpop.f32.mrf.mxu0
    %283 = vmatprep.mubr.f32.mxu0 0.0
    %284 = vmatmul.mubr.f32.gmra.mxu0 %v156
    %v285 = vpop.f32.mrf.mxu0
    %v286 = vadd.f32 %v128, %v285
    %v287 = vpop.f32.mrf.mxu0
    %288 = vmatprep.mubr.f32.mxu0 0.0
    %289 = vmatmul.mubr.f32.gmra.mxu0 %v159
    %v290 = vpop.f32.mrf.mxu0
    %v291 = vadd.f32 %v128, %v290
    %v292 = vpop.f32.mrf.mxu0
    %293 = vmatprep.mubr.f32.mxu0 0.0
    %294 = vmatmul.mubr.f32.gmra.mxu0 %v162
    %v295 = vpop.f32.mrf.mxu0
    %v296 = vadd.f32 %v128, %v295
    %v297 = vpop.f32.mrf.mxu0
    %298 = vmatprep.mubr.f32.mxu0 0.0
    %299 = vmatmul.mubr.f32.gmra.mxu0 %v165
    %v300 = vpop.f32.mrf.mxu0
    %v301 = vadd.f32 %v128, %v300
    %v302 = vpop.f32.mrf.mxu0
    %303 = vmatprep.mubr.f32.mxu0 0.0
    %304 = vmatmul.mubr.f32.gmra.mxu0 %v168
    %v305 = vpop.f32.mrf.mxu0
    %v306 = vadd.f32 %v128, %v305
    %v307 = vpop.f32.mrf.mxu0
    %308 = vmatprep.mubr.f32.mxu0 0.0
    %309 = vmatmul.mubr.f32.gmra.mxu0 %v171
    %v310 = vpop.f32.mrf.mxu0
    %v311 = vadd.f32 %v128, %v310
    %v312 = vpop.f32.mrf.mxu0
    %313 = vmatprep.mubr.f32.mxu0 0.0
    %314 = vmatmul.mubr.f32.gmra.mxu0 %v174
    %v315 = vpop.f32.mrf.mxu0
    %v316 = vadd.f32 %v128, %v315
    %v317 = vpop.f32.mrf.mxu0
    %318 = vmatprep.mubr.f32.mxu0 0.0
    %319 = vmatmul.mubr.f32.gmra.mxu0 %v177
    %v320 = vpop.f32.mrf.mxu0
    %v321 = vadd.f32 %v128, %v320
    %v322 = vpop.f32.mrf.mxu0
    %323 = vdwg.mxu0
    %v324 = vlaneseq
    %v325 = vand.u32 %v324, 127
    %vm326 = vcmp.lt.s32.totalorder %v325, 0
    %v327 = vsub.s32 0, %v325
    %v328 = vsel %vm326, %v327, %v325
    %v329 = vshrl.u32 %v328, 5
    %v330 = vand.u32 %v328, 31
    %v331 = vsub.s32 0, %v330
    %v332 = vsel %vm326, %v331, %v330
    %vm333 = vcmp.ne.s32.totalorder %v332, 0
    %vm334 = vcmp.lt.s32.totalorder %v332, 0
    %vm335 = vmand %vm334, %vm333
    %v336 = vadd.s32 %v332, 32
    %v337 = vsel %vm335, %v336, %v332
    %vm338 = vcmp.lt.s32.totalorder %v337, 16
    %v339 = vsel %vm338, %v246, %v316
    %v340 = vsel %vm338, %v251, %v321
    %v341 = vsel %vm338, %v256, %v306
    %v342 = vsel %vm338, %v261, %v311
    %v343 = vsel %vm338, %v266, %v296
    %v344 = vsel %vm338, %v271, %v301
    %v345 = vsel %vm338, %v276, %v286
    %v346 = vsel %vm338, %v281, %v291
    %v347 = vsel %vm338, %v286, %v276
    %v348 = vsel %vm338, %v291, %v281
    %v349 = vsel %vm338, %v296, %v266
    %v350 = vsel %vm338, %v301, %v271
    %v351 = vsel %vm338, %v306, %v256
    %v352 = vsel %vm338, %v311, %v261
    %v353 = vsel %vm338, %v316, %v246
    %v354 = vsel %vm338, %v321, %v251
    %v355 = vld [vmem:[#allocation5] sm:$0xff]
    %v356 = vld [vmem:[#allocation5 + $0x8] sm:$0xff]
    %v357 = vld [vmem:[#allocation5 + $0x10] sm:$0xff]
    %v358 = vld [vmem:[#allocation5 + $0x18] sm:$0xff]
    %v360 = vsel %vm130, 0.0, 0
    %362 = vmatprep.subr.mxu0 0.0
    %363 = vmatpush1.msra.mxu0 0.0
    %364 = vmatprep.subr.mxu0 0.0
    %365 = vmatpush1.msra.mxu0 0.0
    %366 = vmatprep.subr.mxu0 0.0
    %367 = vmatpush1.msra.mxu0 0.0
    %368 = vmatprep.subr.mxu0 0.0
    %369 = vmatpush1.msra.mxu0 0.0
    %370 = vmatprep.subr.mxu0 0.0
    %371 = vmatpush1.msra.mxu0 0.0
    %372 = vmatprep.subr.mxu0 0.0
    %373 = vmatpush1.msra.mxu0 0.0
    %374 = vmatprep.subr.mxu0 0.0
    %375 = vmatpush1.msra.mxu0 0.0
    %376 = vmatprep.subr.mxu0 0.0
    %377 = vmatpush1.msra.mxu0 0.0
    %378 = vmatprep.subr.mxu0 0.0
    %379 = vmatpush1.msra.mxu0 0.0
    %380 = vmatprep.subr.mxu0 0.0
    %381 = vmatpush1.msra.mxu0 0.0
    %382 = vmatprep.subr.mxu0 0.0
    %383 = vmatpush1.msra.mxu0 0.0
    %384 = vmatprep.subr.mxu0 0.0
    %385 = vmatpush1.msra.mxu0 0.0
    %386 = vmatprep.subr.mxu0 0.0
    %387 = vmatpush1.msra.mxu0 %v358
    %388 = vmatprep.subr.mxu0 0.0
    %389 = vmatpush1.msra.mxu0 %v357
    %390 = vmatprep.subr.mxu0 0.0
    %391 = vmatpush1.msra.mxu0 %v356
    %392 = vmatprep.subr.mxu0 0.0
    %393 = vmatpush1.msra.mxu0 %v355
    %394 = vmatprep.subr.mxu0 0.0
    %395 = vmatpush2.msra.mxu0 0.0
    %396 = vmatprep.subr.mxu0 0.0
    %397 = vmatpush2.msra.mxu0 0.0
    %398 = vmatprep.subr.mxu0 0.0
    %399 = vmatpush2.msra.mxu0 0.0
    %400 = vmatprep.subr.mxu0 0.0
    %401 = vmatpush2.msra.mxu0 0.0
    %402 = vmatprep.subr.mxu0 0.0
    %403 = vmatpush2.msra.mxu0 0.0
    %404 = vmatprep.subr.mxu0 0.0
    %405 = vmatpush2.msra.mxu0 0.0
    %406 = vmatprep.subr.mxu0 0.0
    %407 = vmatpush2.msra.mxu0 0.0
    %408 = vmatprep.subr.mxu0 0.0
    %409 = vmatpush2.msra.mxu0 0.0
    %410 = vmatprep.subr.mxu0 0.0
    %411 = vmatpush2.msra.mxu0 0.0
    %412 = vmatprep.subr.mxu0 0.0
    %413 = vmatpush2.msra.mxu0 0.0
    %414 = vmatprep.subr.mxu0 0.0
    %415 = vmatpush2.msra.mxu0 0.0
    %416 = vmatprep.subr.mxu0 0.0
    %417 = vmatpush2.msra.mxu0 0.0
    %418 = vmatprep.subr.mxu0 0.0
    %419 = vmatpush2.msra.mxu0 0.0
    %420 = vmatprep.subr.mxu0 0.0
    %421 = vmatpush2.msra.mxu0 0.0
    %422 = vmatprep.subr.mxu0 0.0
    %423 = vmatpush2.msra.mxu0 0.0
    %424 = vmatprep.subr.mxu0 0.0
    %425 = vmatpush2.msra.mxu0 0.0
    %426 = vmatprep.mubr.f32.mxu0 0.0
    %427 = vmatmul.mubr.f32.gmra.mxu0 %v360
    %v428 = vpop.f32.mrf.mxu0
    %v429 = vadd.f32 0.0, %v428
    %v430 = vpop.f32.mrf.mxu0
    %431 = vmatprep.mubr.f32.mxu0 0.0
    %432 = vmatmul.mubr.f32.gmra.mxu0 %v360
    %v433 = vpop.f32.mrf.mxu0
    %v434 = vadd.f32 0.0, %v433
    %v435 = vpop.f32.mrf.mxu0
    %436 = vdwg.mxu0
    %v437 = vadd.f32 %v339, %v429
    %v438 = vadd.f32 %v340, %v434
    %v439 = vxor.u32 %v437, 2147483648
    %v440 = vxor.u32 %v438, 2147483648
    %v441 = vmul.f32 %v439, 1.442695
    %v442 = vpow.pop %v441
    %v443 = vmul.f32 %v440, 1.442695
    %v444 = vpow.pop %v443
    %v445 = vadd.f32 %v442, 1.0
    %v446 = vadd.f32 %v444, 1.0
    %v447 = vrcp.pop %v445
    %v448 = vmul.f32 1.0, %v447
    %v449 = vrcp.pop %v446
    %v450 = vmul.f32 1.0, %v449
    %v451 = vtanh.pop %v437
    %v452 = vtanh.pop %v438
    %v453 = vmul.f32 %v448, 0.0
    %v454 = vmul.f32 %v450, 0.0
    %457 = vrot.lane.b32.xlu0 %v451, 32
    %v458 = vpop.permute.xlu0 %457
    %459 = vrot.lane.b32.xlu0 %v452, 32
    %v460 = vpop.permute.xlu0 %459
    %v463 = vmul.f32 %v448, %v458
    %v464 = vmul.f32 %v450, %v460
    %467 = vrot.lane.b32.xlu0 %v463, 32
    %v468 = vpop.permute.xlu0 %467
    %469 = vrot.lane.b32.xlu0 %v464, 32
    %v470 = vpop.permute.xlu0 %469
    %v473 = vadd.f32 %v453, %v468
    %v474 = vadd.f32 %v454, %v470
    %v475 = vtanh.pop %v473
    %v476 = vtanh.pop %v474
    %479 = vrot.lane.b32.xlu0 %v475, 32
    %v480 = vpop.permute.xlu0 %479
    %481 = vrot.lane.b32.xlu0 %v476, 32
    %v482 = vpop.permute.xlu0 %481
    %v485 = vmul.f32 %v448, %v480
    %v486 = vmul.f32 %v450, %v482
    %489 = vrot.lane.b32.xlu0 %v485, 64
    %v490 = vpop.permute.xlu0 %489
    %491 = vrot.lane.b32.xlu0 %v486, 64
    %v492 = vpop.permute.xlu0 %491
    %495 = vst.msk [vmem:[#allocation2] sm:$0xff] %vm130, %v490
    %496 = vst.msk [vmem:[#allocation2 + $0x8] sm:$0xff] %vm130, %v492
    %v497 = vsel %vm130, %v490, 0
    %v499 = vsel %vm130, %v492, 0
    %501 = vmatprep.subr.mxu0 0.0
    %502 = vmatpush1.msra.mxu0 0.0
    %503 = vmatprep.subr.mxu0 0.0
    %504 = vmatpush1.msra.mxu0 0.0
    %505 = vmatprep.subr.mxu0 0.0
    %506 = vmatpush1.msra.mxu0 0.0
    %507 = vmatprep.subr.mxu0 0.0
    %508 = vmatpush1.msra.mxu0 0.0
    %509 = vmatprep.subr.mxu0 0.0
    %510 = vmatpush1.msra.mxu0 0.0
    %511 = vmatprep.subr.mxu0 0.0
    %512 = vmatpush1.msra.mxu0 0.0
    %513 = vmatprep.subr.mxu0 0.0
    %514 = vmatpush1.msra.mxu0 0.0
    %515 = vmatprep.subr.mxu0 0.0
    %516 = vmatpush1.msra.mxu0 0.0
    %517 = vmatprep.subr.mxu0 0.0
    %518 = vmatpush1.msra.mxu0 0.0
    %519 = vmatprep.subr.mxu0 0.0
    %520 = vmatpush1.msra.mxu0 0.0
    %521 = vmatprep.subr.mxu0 0.0
    %522 = vmatpush1.msra.mxu0 0.0
    %523 = vmatprep.subr.mxu0 0.0
    %524 = vmatpush1.msra.mxu0 0.0
    %525 = vmatprep.subr.mxu0 0.0
    %526 = vmatpush1.msra.mxu0 %v358
    %527 = vmatprep.subr.mxu0 0.0
    %528 = vmatpush1.msra.mxu0 %v357
    %529 = vmatprep.subr.mxu0 0.0
    %530 = vmatpush1.msra.mxu0 %v356
    %531 = vmatprep.subr.mxu0 0.0
    %532 = vmatpush1.msra.mxu0 %v355
    %533 = vmatprep.subr.mxu0 0.0
    %534 = vmatpush2.msra.mxu0 0.0
    %535 = vmatprep.subr.mxu0 0.0
    %536 = vmatpush2.msra.mxu0 0.0
    %537 = vmatprep.subr.mxu0 0.0
    %538 = vmatpush2.msra.mxu0 0.0
    %539 = vmatprep.subr.mxu0 0.0
    %540 = vmatpush2.msra.mxu0 0.0
    %541 = vmatprep.subr.mxu0 0.0
    %542 = vmatpush2.msra.mxu0 0.0
    %543 = vmatprep.subr.mxu0 0.0
    %544 = vmatpush2.msra.mxu0 0.0
    %545 = vmatprep.subr.mxu0 0.0
    %546 = vmatpush2.msra.mxu0 0.0
    %547 = vmatprep.subr.mxu0 0.0
    %548 = vmatpush2.msra.mxu0 0.0
    %549 = vmatprep.subr.mxu0 0.0
    %550 = vmatpush2.msra.mxu0 0.0
    %551 = vmatprep.subr.mxu0 0.0
    %552 = vmatpush2.msra.mxu0 0.0
    %553 = vmatprep.subr.mxu0 0.0
    %554 = vmatpush2.msra.mxu0 0.0
    %555 = vmatprep.subr.mxu0 0.0
    %556 = vmatpush2.msra.mxu0 0.0
    %557 = vmatprep.subr.mxu0 0.0
    %558 = vmatpush2.msra.mxu0 0.0
    %559 = vmatprep.subr.mxu0 0.0
    %560 = vmatpush2.msra.mxu0 0.0
    %561 = vmatprep.subr.mxu0 0.0
    %562 = vmatpush2.msra.mxu0 0.0
    %563 = vmatprep.subr.mxu0 0.0
    %564 = vmatpush2.msra.mxu0 0.0
    %565 = vmatprep.mubr.f32.mxu0 0.0
    %566 = vmatmul.mubr.f32.gmra.mxu0 %v497
    %v567 = vpop.f32.mrf.mxu0
    %v568 = vadd.f32 0.0, %v567
    %v569 = vpop.f32.mrf.mxu0
    %570 = vmatprep.mubr.f32.mxu0 0.0
    %571 = vmatmul.mubr.f32.gmra.mxu0 %v499
    %v572 = vpop.f32.mrf.mxu0
    %v573 = vadd.f32 0.0, %v572
    %v574 = vpop.f32.mrf.mxu0
    %575 = vdwg.mxu0
    %v576 = vadd.f32 %v341, %v568
    %v577 = vadd.f32 %v342, %v573
    %v578 = vxor.u32 %v576, 2147483648
    %v579 = vxor.u32 %v577, 2147483648
    %v580 = vmul.f32 %v578, 1.442695
    %v581 = vpow.pop %v580
    %v582 = vmul.f32 %v579, 1.442695
    %v583 = vpow.pop %v582
    %v584 = vadd.f32 %v581, 1.0
    %v585 = vadd.f32 %v583, 1.0
    %v586 = vrcp.pop %v584
    %v587 = vmul.f32 1.0, %v586
    %v588 = vrcp.pop %v585
    %v589 = vmul.f32 1.0, %v588
    %v590 = vtanh.pop %v576
    %v591 = vtanh.pop %v577
    %v592 = vmul.f32 %v587, %v473
    %v593 = vmul.f32 %v589, %v474
    %596 = vrot.lane.b32.xlu0 %v590, 32
    %v597 = vpop.permute.xlu0 %596
    %598 = vrot.lane.b32.xlu0 %v591, 32
    %v599 = vpop.permute.xlu0 %598
    %v602 = vmul.f32 %v587, %v597
    %v603 = vmul.f32 %v589, %v599
    %606 = vrot.lane.b32.xlu0 %v602, 32
    %v607 = vpop.permute.xlu0 %606
    %608 = vrot.lane.b32.xlu0 %v603, 32
    %v609 = vpop.permute.xlu0 %608
    %v612 = vadd.f32 %v592, %v607
    %v613 = vadd.f32 %v593, %v609
    %v614 = vtanh.pop %v612
    %v615 = vtanh.pop %v613
    %618 = vrot.lane.b32.xlu0 %v614, 32
    %v619 = vpop.permute.xlu0 %618
    %620 = vrot.lane.b32.xlu0 %v615, 32
    %v621 = vpop.permute.xlu0 %620
    %v624 = vmul.f32 %v587, %v619
    %v625 = vmul.f32 %v589, %v621
    %628 = vrot.lane.b32.xlu0 %v624, 64
    %v629 = vpop.permute.xlu0 %628
    %630 = vrot.lane.b32.xlu0 %v625, 64
    %v631 = vpop.permute.xlu0 %630
    %634 = vst.msk [vmem:[#allocation2 + $0x10] sm:$0xff] %vm130, %v629
    %635 = vst.msk [vmem:[#allocation2 + $0x18] sm:$0xff] %vm130, %v631
    %v636 = vsel %vm130, %v629, 0
    %v638 = vsel %vm130, %v631, 0
    %640 = vmatprep.subr.mxu0 0.0
    %641 = vmatpush1.msra.mxu0 0.0
    %642 = vmatprep.subr.mxu0 0.0
    %643 = vmatpush1.msra.mxu0 0.0
    %644 = vmatprep.subr.mxu0 0.0
    %645 = vmatpush1.msra.mxu0 0.0
    %646 = vmatprep.subr.mxu0 0.0
    %647 = vmatpush1.msra.mxu0 0.0
    %648 = vmatprep.subr.mxu0 0.0
    %649 = vmatpush1.msra.mxu0 0.0
    %650 = vmatprep.subr.mxu0 0.0
    %651 = vmatpush1.msra.mxu0 0.0
    %652 = vmatprep.subr.mxu0 0.0
    %653 = vmatpush1.msra.mxu0 0.0
    %654 = vmatprep.subr.mxu0 0.0
    %655 = vmatpush1.msra.mxu0 0.0
    %656 = vmatprep.subr.mxu0 0.0
    %657 = vmatpush1.msra.mxu0 0.0
    %658 = vmatprep.subr.mxu0 0.0
    %659 = vmatpush1.msra.mxu0 0.0
    %660 = vmatprep.subr.mxu0 0.0
    %661 = vmatpush1.msra.mxu0 0.0
    %662 = vmatprep.subr.mxu0 0.0
    %663 = vmatpush1.msra.mxu0 0.0
    %664 = vmatprep.subr.mxu0 0.0
    %665 = vmatpush1.msra.mxu0 %v358
    %666 = vmatprep.subr.mxu0 0.0
    %667 = vmatpush1.msra.mxu0 %v357
    %668 = vmatprep.subr.mxu0 0.0
    %669 = vmatpush1.msra.mxu0 %v356
    %670 = vmatprep.subr.mxu0 0.0
    %671 = vmatpush1.msra.mxu0 %v355
    %672 = vmatprep.subr.mxu0 0.0
    %673 = vmatpush2.msra.mxu0 0.0
    %674 = vmatprep.subr.mxu0 0.0
    %675 = vmatpush2.msra.mxu0 0.0
    %676 = vmatprep.subr.mxu0 0.0
    %677 = vmatpush2.msra.mxu0 0.0
    %678 = vmatprep.subr.mxu0 0.0
    %679 = vmatpush2.msra.mxu0 0.0
    %680 = vmatprep.subr.mxu0 0.0
    %681 = vmatpush2.msra.mxu0 0.0
    %682 = vmatprep.subr.mxu0 0.0
    %683 = vmatpush2.msra.mxu0 0.0
    %684 = vmatprep.subr.mxu0 0.0
    %685 = vmatpush2.msra.mxu0 0.0
    %686 = vmatprep.subr.mxu0 0.0
    %687 = vmatpush2.msra.mxu0 0.0
    %688 = vmatprep.subr.mxu0 0.0
    %689 = vmatpush2.msra.mxu0 0.0
    %690 = vmatprep.subr.mxu0 0.0
    %691 = vmatpush2.msra.mxu0 0.0
    %692 = vmatprep.subr.mxu0 0.0
    %693 = vmatpush2.msra.mxu0 0.0
    %694 = vmatprep.subr.mxu0 0.0
    %695 = vmatpush2.msra.mxu0 0.0
    %696 = vmatprep.subr.mxu0 0.0
    %697 = vmatpush2.msra.mxu0 0.0
    %698 = vmatprep.subr.mxu0 0.0
    %699 = vmatpush2.msra.mxu0 0.0
    %700 = vmatprep.subr.mxu0 0.0
    %701 = vmatpush2.msra.mxu0 0.0
    %702 = vmatprep.subr.mxu0 0.0
    %703 = vmatpush2.msra.mxu0 0.0
    %704 = vmatprep.mubr.f32.mxu0 0.0
    %705 = vmatmul.mubr.f32.gmra.mxu0 %v636
    %v706 = vpop.f32.mrf.mxu0
    %v707 = vadd.f32 0.0, %v706
    %v708 = vpop.f32.mrf.mxu0
    %709 = vmatprep.mubr.f32.mxu0 0.0
    %710 = vmatmul.mubr.f32.gmra.mxu0 %v638
    %v711 = vpop.f32.mrf.mxu0
    %v712 = vadd.f32 0.0, %v711
    %v713 = vpop.f32.mrf.mxu0
    %714 = vdwg.mxu0
    %v715 = vadd.f32 %v343, %v707
    %v716 = vadd.f32 %v344, %v712
    %v717 = vxor.u32 %v715, 2147483648
    %v718 = vxor.u32 %v716, 2147483648
    %v719 = vmul.f32 %v717, 1.442695
    %v720 = vpow.pop %v719
    %v721 = vmul.f32 %v718, 1.442695
    %v722 = vpow.pop %v721
    %v723 = vadd.f32 %v720, 1.0
    %v724 = vadd.f32 %v722, 1.0
    %v725 = vrcp.pop %v723
    %v726 = vmul.f32 1.0, %v725
    %v727 = vrcp.pop %v724
    %v728 = vmul.f32 1.0, %v727
    %v729 = vtanh.pop %v715
    %v730 = vtanh.pop %v716
    %v731 = vmul.f32 %v726, %v612
    %v732 = vmul.f32 %v728, %v613
    %735 = vrot.lane.b32.xlu0 %v729, 32
    %v736 = vpop.permute.xlu0 %735
    %737 = vrot.lane.b32.xlu0 %v730, 32
    %v738 = vpop.permute.xlu0 %737
    %v741 = vmul.f32 %v726, %v736
    %v742 = vmul.f32 %v728, %v738
    %745 = vrot.lane.b32.xlu0 %v741, 32
    %v746 = vpop.permute.xlu0 %745
    %747 = vrot.lane.b32.xlu0 %v742, 32
    %v748 = vpop.permute.xlu0 %747
    %v751 = vadd.f32 %v731, %v746
    %v752 = vadd.f32 %v732, %v748
    %v753 = vtanh.pop %v751
    %v754 = vtanh.pop %v752
    %757 = vrot.lane.b32.xlu0 %v753, 32
    %v758 = vpop.permute.xlu0 %757
    %759 = vrot.lane.b32.xlu0 %v754, 32
    %v760 = vpop.permute.xlu0 %759
    %v763 = vmul.f32 %v726, %v758
    %v764 = vmul.f32 %v728, %v760
    %767 = vrot.lane.b32.xlu0 %v763, 64
    %v768 = vpop.permute.xlu0 %767
    %769 = vrot.lane.b32.xlu0 %v764, 64
    %v770 = vpop.permute.xlu0 %769
    %773 = vst.msk [vmem:[#allocation2 + $0x20] sm:$0xff] %vm130, %v768
    %774 = vst.msk [vmem:[#allocation2 + $0x28] sm:$0xff] %vm130, %v770
    %v775 = vsel %vm130, %v768, 0
    %v777 = vsel %vm130, %v770, 0
    %779 = vmatprep.subr.mxu0 0.0
    %780 = vmatpush1.msra.mxu0 0.0
    %781 = vmatprep.subr.mxu0 0.0
    %782 = vmatpush1.msra.mxu0 0.0
    %783 = vmatprep.subr.mxu0 0.0
    %784 = vmatpush1.msra.mxu0 0.0
    %785 = vmatprep.subr.mxu0 0.0
    %786 = vmatpush1.msra.mxu0 0.0
    %787 = vmatprep.subr.mxu0 0.0
    %788 = vmatpush1.msra.mxu0 0.0
    %789 = vmatprep.subr.mxu0 0.0
    %790 = vmatpush1.msra.mxu0 0.0
    %791 = vmatprep.subr.mxu0 0.0
    %792 = vmatpush1.msra.mxu0 0.0
    %793 = vmatprep.subr.mxu0 0.0
    %794 = vmatpush1.msra.mxu0 0.0
    %795 = vmatprep.subr.mxu0 0.0
    %796 = vmatpush1.msra.mxu0 0.0
    %797 = vmatprep.subr.mxu0 0.0
    %798 = vmatpush1.msra.mxu0 0.0
    %799 = vmatprep.subr.mxu0 0.0
    %800 = vmatpush1.msra.mxu0 0.0
    %801 = vmatprep.subr.mxu0 0.0
    %802 = vmatpush1.msra.mxu0 0.0
    %803 = vmatprep.subr.mxu0 0.0
    %804 = vmatpush1.msra.mxu0 %v358
    %805 = vmatprep.subr.mxu0 0.0
    %806 = vmatpush1.msra.mxu0 %v357
    %807 = vmatprep.subr.mxu0 0.0
    %808 = vmatpush1.msra.mxu0 %v356
    %809 = vmatprep.subr.mxu0 0.0
    %810 = vmatpush1.msra.mxu0 %v355
    %811 = vmatprep.subr.mxu0 0.0
    %812 = vmatpush2.msra.mxu0 0.0
    %813 = vmatprep.subr.mxu0 0.0
    %814 = vmatpush2.msra.mxu0 0.0
    %815 = vmatprep.subr.mxu0 0.0
    %816 = vmatpush2.msra.mxu0 0.0
    %817 = vmatprep.subr.mxu0 0.0
    %818 = vmatpush2.msra.mxu0 0.0
    %819 = vmatprep.subr.mxu0 0.0
    %820 = vmatpush2.msra.mxu0 0.0
    %821 = vmatprep.subr.mxu0 0.0
    %822 = vmatpush2.msra.mxu0 0.0
    %823 = vmatprep.subr.mxu0 0.0
    %824 = vmatpush2.msra.mxu0 0.0
    %825 = vmatprep.subr.mxu0 0.0
    %826 = vmatpush2.msra.mxu0 0.0
    %827 = vmatprep.subr.mxu0 0.0
    %828 = vmatpush2.msra.mxu0 0.0
    %829 = vmatprep.subr.mxu0 0.0
    %830 = vmatpush2.msra.mxu0 0.0
    %831 = vmatprep.subr.mxu0 0.0
    %832 = vmatpush2.msra.mxu0 0.0
    %833 = vmatprep.subr.mxu0 0.0
    %834 = vmatpush2.msra.mxu0 0.0
    %835 = vmatprep.subr.mxu0 0.0
    %836 = vmatpush2.msra.mxu0 0.0
    %837 = vmatprep.subr.mxu0 0.0
    %838 = vmatpush2.msra.mxu0 0.0
    %839 = vmatprep.subr.mxu0 0.0
    %840 = vmatpush2.msra.mxu0 0.0
    %841 = vmatprep.subr.mxu0 0.0
    %842 = vmatpush2.msra.mxu0 0.0
    %843 = vmatprep.mubr.f32.mxu0 0.0
    %844 = vmatmul.mubr.f32.gmra.mxu0 %v775
    %v845 = vpop.f32.mrf.mxu0
    %v846 = vadd.f32 0.0, %v845
    %v847 = vpop.f32.mrf.mxu0
    %848 = vmatprep.mubr.f32.mxu0 0.0
    %849 = vmatmul.mubr.f32.gmra.mxu0 %v777
    %v850 = vpop.f32.mrf.mxu0
    %v851 = vadd.f32 0.0, %v850
    %v852 = vpop.f32.mrf.mxu0
    %853 = vdwg.mxu0
    %v854 = vadd.f32 %v345, %v846
    %v855 = vadd.f32 %v346, %v851
    %v856 = vxor.u32 %v854, 2147483648
    %v857 = vxor.u32 %v855, 2147483648
    %v858 = vmul.f32 %v856, 1.442695
    %v859 = vpow.pop %v858
    %v860 = vmul.f32 %v857, 1.442695
    %v861 = vpow.pop %v860
    %v862 = vadd.f32 %v859, 1.0
    %v863 = vadd.f32 %v861, 1.0
    %v864 = vrcp.pop %v862
    %v865 = vmul.f32 1.0, %v864
    %v866 = vrcp.pop %v863
    %v867 = vmul.f32 1.0, %v866
    %v868 = vtanh.pop %v854
    %v869 = vtanh.pop %v855
    %v870 = vmul.f32 %v865, %v751
    %v871 = vmul.f32 %v867, %v752
    %874 = vrot.lane.b32.xlu0 %v868, 32
    %v875 = vpop.permute.xlu0 %874
    %876 = vrot.lane.b32.xlu0 %v869, 32
    %v877 = vpop.permute.xlu0 %876
    %v880 = vmul.f32 %v865, %v875
    %v881 = vmul.f32 %v867, %v877
    %884 = vrot.lane.b32.xlu0 %v880, 32
    %v885 = vpop.permute.xlu0 %884
    %886 = vrot.lane.b32.xlu0 %v881, 32
    %v887 = vpop.permute.xlu0 %886
    %v890 = vadd.f32 %v870, %v885
    %v891 = vadd.f32 %v871, %v887
    %v892 = vtanh.pop %v890
    %v893 = vtanh.pop %v891
    %896 = vrot.lane.b32.xlu0 %v892, 32
    %v897 = vpop.permute.xlu0 %896
    %898 = vrot.lane.b32.xlu0 %v893, 32
    %v899 = vpop.permute.xlu0 %898
    %v902 = vmul.f32 %v865, %v897
    %v903 = vmul.f32 %v867, %v899
    %906 = vrot.lane.b32.xlu0 %v902, 64
    %v907 = vpop.permute.xlu0 %906
    %908 = vrot.lane.b32.xlu0 %v903, 64
    %v909 = vpop.permute.xlu0 %908
    %912 = vst.msk [vmem:[#allocation2 + $0x30] sm:$0xff] %vm130, %v907
    %913 = vst.msk [vmem:[#allocation2 + $0x38] sm:$0xff] %vm130, %v909
    %v914 = vsel %vm130, %v907, 0
    %v916 = vsel %vm130, %v909, 0
    %918 = vmatprep.subr.mxu0 0.0
    %919 = vmatpush1.msra.mxu0 0.0
    %920 = vmatprep.subr.mxu0 0.0
    %921 = vmatpush1.msra.mxu0 0.0
    %922 = vmatprep.subr.mxu0 0.0
    %923 = vmatpush1.msra.mxu0 0.0
    %924 = vmatprep.subr.mxu0 0.0
    %925 = vmatpush1.msra.mxu0 0.0
    %926 = vmatprep.subr.mxu0 0.0
    %927 = vmatpush1.msra.mxu0 0.0
    %928 = vmatprep.subr.mxu0 0.0
    %929 = vmatpush1.msra.mxu0 0.0
    %930 = vmatprep.subr.mxu0 0.0
    %931 = vmatpush1.msra.mxu0 0.0
    %932 = vmatprep.subr.mxu0 0.0
    %933 = vmatpush1.msra.mxu0 0.0
    %934 = vmatprep.subr.mxu0 0.0
    %935 = vmatpush1.msra.mxu0 0.0
    %936 = vmatprep.subr.mxu0 0.0
    %937 = vmatpush1.msra.mxu0 0.0
    %938 = vmatprep.subr.mxu0 0.0
    %939 = vmatpush1.msra.mxu0 0.0
    %940 = vmatprep.subr.mxu0 0.0
    %941 = vmatpush1.msra.mxu0 0.0
    %942 = vmatprep.subr.mxu0 0.0
    %943 = vmatpush1.msra.mxu0 %v358
    %944 = vmatprep.subr.mxu0 0.0
    %945 = vmatpush1.msra.mxu0 %v357
    %946 = vmatprep.subr.mxu0 0.0
    %947 = vmatpush1.msra.mxu0 %v356
    %948 = vmatprep.subr.mxu0 0.0
    %949 = vmatpush1.msra.mxu0 %v355
    %950 = vmatprep.subr.mxu0 0.0
    %951 = vmatpush2.msra.mxu0 0.0
    %952 = vmatprep.subr.mxu0 0.0
    %953 = vmatpush2.msra.mxu0 0.0
    %954 = vmatprep.subr.mxu0 0.0
    %955 = vmatpush2.msra.mxu0 0.0
    %956 = vmatprep.subr.mxu0 0.0
    %957 = vmatpush2.msra.mxu0 0.0
    %958 = vmatprep.subr.mxu0 0.0
    %959 = vmatpush2.msra.mxu0 0.0
    %960 = vmatprep.subr.mxu0 0.0
    %961 = vmatpush2.msra.mxu0 0.0
    %962 = vmatprep.subr.mxu0 0.0
    %963 = vmatpush2.msra.mxu0 0.0
    %964 = vmatprep.subr.mxu0 0.0
    %965 = vmatpush2.msra.mxu0 0.0
    %966 = vmatprep.subr.mxu0 0.0
    %967 = vmatpush2.msra.mxu0 0.0
    %968 = vmatprep.subr.mxu0 0.0
    %969 = vmatpush2.msra.mxu0 0.0
    %970 = vmatprep.subr.mxu0 0.0
    %971 = vmatpush2.msra.mxu0 0.0
    %972 = vmatprep.subr.mxu0 0.0
    %973 = vmatpush2.msra.mxu0 0.0
    %974 = vmatprep.subr.mxu0 0.0
    %975 = vmatpush2.msra.mxu0 0.0
    %976 = vmatprep.subr.mxu0 0.0
    %977 = vmatpush2.msra.mxu0 0.0
    %978 = vmatprep.subr.mxu0 0.0
    %979 = vmatpush2.msra.mxu0 0.0
    %980 = vmatprep.subr.mxu0 0.0
    %981 = vmatpush2.msra.mxu0 0.0
    %982 = vmatprep.mubr.f32.mxu0 0.0
    %983 = vmatmul.mubr.f32.gmra.mxu0 %v914
    %v984 = vpop.f32.mrf.mxu0
    %v985 = vadd.f32 0.0, %v984
    %v986 = vpop.f32.mrf.mxu0
    %987 = vmatprep.mubr.f32.mxu0 0.0
    %988 = vmatmul.mubr.f32.gmra.mxu0 %v916
    %v989 = vpop.f32.mrf.mxu0
    %v990 = vadd.f32 0.0, %v989
    %v991 = vpop.f32.mrf.mxu0
    %992 = vdwg.mxu0
    %v993 = vadd.f32 %v347, %v985
    %v994 = vadd.f32 %v348, %v990
    %v995 = vxor.u32 %v993, 2147483648
    %v996 = vxor.u32 %v994, 2147483648
    %v997 = vmul.f32 %v995, 1.442695
    %v998 = vpow.pop %v997
    %v999 = vmul.f32 %v996, 1.442695
    %v1000 = vpow.pop %v999
    %v1001 = vadd.f32 %v998, 1.0
    %v1002 = vadd.f32 %v1000, 1.0
    %v1003 = vrcp.pop %v1001
    %v1004 = vmul.f32 1.0, %v1003
    %v1005 = vrcp.pop %v1002
    %v1006 = vmul.f32 1.0, %v1005
    %v1007 = vtanh.pop %v993
    %v1008 = vtanh.pop %v994
    %v1009 = vmul.f32 %v1004, %v890
    %v1010 = vmul.f32 %v1006, %v891
    %1013 = vrot.lane.b32.xlu0 %v1007, 32
    %v1014 = vpop.permute.xlu0 %1013
    %1015 = vrot.lane.b32.xlu0 %v1008, 32
    %v1016 = vpop.permute.xlu0 %1015
    %v1019 = vmul.f32 %v1004, %v1014
    %v1020 = vmul.f32 %v1006, %v1016
    %1023 = vrot.lane.b32.xlu0 %v1019, 32
    %v1024 = vpop.permute.xlu0 %1023
    %1025 = vrot.lane.b32.xlu0 %v1020, 32
    %v1026 = vpop.permute.xlu0 %1025
    %v1029 = vadd.f32 %v1009, %v1024
    %v1030 = vadd.f32 %v1010, %v1026
    %v1031 = vtanh.pop %v1029
    %v1032 = vtanh.pop %v1030
    %1035 = vrot.lane.b32.xlu0 %v1031, 32
    %v1036 = vpop.permute.xlu0 %1035
    %1037 = vrot.lane.b32.xlu0 %v1032, 32
    %v1038 = vpop.permute.xlu0 %1037
    %v1041 = vmul.f32 %v1004, %v1036
    %v1042 = vmul.f32 %v1006, %v1038
    %1045 = vrot.lane.b32.xlu0 %v1041, 64
    %v1046 = vpop.permute.xlu0 %1045
    %1047 = vrot.lane.b32.xlu0 %v1042, 64
    %v1048 = vpop.permute.xlu0 %1047
    %1051 = vst.msk [vmem:[#allocation2 + $0x40] sm:$0xff] %vm130, %v1046
    %1052 = vst.msk [vmem:[#allocation2 + $0x48] sm:$0xff] %vm130, %v1048
    %v1053 = vsel %vm130, %v1046, 0
    %v1055 = vsel %vm130, %v1048, 0
    %1057 = vmatprep.subr.mxu0 0.0
    %1058 = vmatpush1.msra.mxu0 0.0
    %1059 = vmatprep.subr.mxu0 0.0
    %1060 = vmatpush1.msra.mxu0 0.0
    %1061 = vmatprep.subr.mxu0 0.0
    %1062 = vmatpush1.msra.mxu0 0.0
    %1063 = vmatprep.subr.mxu0 0.0
    %1064 = vmatpush1.msra.mxu0 0.0
    %1065 = vmatprep.subr.mxu0 0.0
    %1066 = vmatpush1.msra.mxu0 0.0
    %1067 = vmatprep.subr.mxu0 0.0
    %1068 = vmatpush1.msra.mxu0 0.0
    %1069 = vmatprep.subr.mxu0 0.0
    %1070 = vmatpush1.msra.mxu0 0.0
    %1071 = vmatprep.subr.mxu0 0.0
    %1072 = vmatpush1.msra.mxu0 0.0
    %1073 = vmatprep.subr.mxu0 0.0
    %1074 = vmatpush1.msra.mxu0 0.0
    %1075 = vmatprep.subr.mxu0 0.0
    %1076 = vmatpush1.msra.mxu0 0.0
    %1077 = vmatprep.subr.mxu0 0.0
    %1078 = vmatpush1.msra.mxu0 0.0
    %1079 = vmatprep.subr.mxu0 0.0
    %1080 = vmatpush1.msra.mxu0 0.0
    %1081 = vmatprep.subr.mxu0 0.0
    %1082 = vmatpush1.msra.mxu0 %v358
    %1083 = vmatprep.subr.mxu0 0.0
    %1084 = vmatpush1.msra.mxu0 %v357
    %1085 = vmatprep.subr.mxu0 0.0
    %1086 = vmatpush1.msra.mxu0 %v356
    %1087 = vmatprep.subr.mxu0 0.0
    %1088 = vmatpush1.msra.mxu0 %v355
    %1089 = vmatprep.subr.mxu0 0.0
    %1090 = vmatpush2.msra.mxu0 0.0
    %1091 = vmatprep.subr.mxu0 0.0
    %1092 = vmatpush2.msra.mxu0 0.0
    %1093 = vmatprep.subr.mxu0 0.0
    %1094 = vmatpush2.msra.mxu0 0.0
    %1095 = vmatprep.subr.mxu0 0.0
    %1096 = vmatpush2.msra.mxu0 0.0
    %1097 = vmatprep.subr.mxu0 0.0
    %1098 = vmatpush2.msra.mxu0 0.0
    %1099 = vmatprep.subr.mxu0 0.0
    %1100 = vmatpush2.msra.mxu0 0.0
    %1101 = vmatprep.subr.mxu0 0.0
    %1102 = vmatpush2.msra.mxu0 0.0
    %1103 = vmatprep.subr.mxu0 0.0
    %1104 = vmatpush2.msra.mxu0 0.0
    %1105 = vmatprep.subr.mxu0 0.0
    %1106 = vmatpush2.msra.mxu0 0.0
    %1107 = vmatprep.subr.mxu0 0.0
    %1108 = vmatpush2.msra.mxu0 0.0
    %1109 = vmatprep.subr.mxu0 0.0
    %1110 = vmatpush2.msra.mxu0 0.0
    %1111 = vmatprep.subr.mxu0 0.0
    %1112 = vmatpush2.msra.mxu0 0.0
    %1113 = vmatprep.subr.mxu0 0.0
    %1114 = vmatpush2.msra.mxu0 0.0
    %1115 = vmatprep.subr.mxu0 0.0
    %1116 = vmatpush2.msra.mxu0 0.0
    %1117 = vmatprep.subr.mxu0 0.0
    %1118 = vmatpush2.msra.mxu0 0.0
    %1119 = vmatprep.subr.mxu0 0.0
    %1120 = vmatpush2.msra.mxu0 0.0
    %1121 = vmatprep.mubr.f32.mxu0 0.0
    %1122 = vmatmul.mubr.f32.gmra.mxu0 %v1053
    %v1123 = vpop.f32.mrf.mxu0
    %v1124 = vadd.f32 0.0, %v1123
    %v1125 = vpop.f32.mrf.mxu0
    %1126 = vmatprep.mubr.f32.mxu0 0.0
    %1127 = vmatmul.mubr.f32.gmra.mxu0 %v1055
    %v1128 = vpop.f32.mrf.mxu0
    %v1129 = vadd.f32 0.0, %v1128
    %v1130 = vpop.f32.mrf.mxu0
    %1131 = vdwg.mxu0
    %v1132 = vadd.f32 %v349, %v1124
    %v1133 = vadd.f32 %v350, %v1129
    %v1134 = vxor.u32 %v1132, 2147483648
    %v1135 = vxor.u32 %v1133, 2147483648
    %v1136 = vmul.f32 %v1134, 1.442695
    %v1137 = vpow.pop %v1136
    %v1138 = vmul.f32 %v1135, 1.442695
    %v1139 = vpow.pop %v1138
    %v1140 = vadd.f32 %v1137, 1.0
    %v1141 = vadd.f32 %v1139, 1.0
    %v1142 = vrcp.pop %v1140
    %v1143 = vmul.f32 1.0, %v1142
    %v1144 = vrcp.pop %v1141
    %v1145 = vmul.f32 1.0, %v1144
    %v1146 = vtanh.pop %v1132
    %v1147 = vtanh.pop %v1133
    %v1148 = vmul.f32 %v1143, %v1029
    %v1149 = vmul.f32 %v1145, %v1030
    %1152 = vrot.lane.b32.xlu0 %v1146, 32
    %v1153 = vpop.permute.xlu0 %1152
    %1154 = vrot.lane.b32.xlu0 %v1147, 32
    %v1155 = vpop.permute.xlu0 %1154
    %v1158 = vmul.f32 %v1143, %v1153
    %v1159 = vmul.f32 %v1145, %v1155
    %1162 = vrot.lane.b32.xlu0 %v1158, 32
    %v1163 = vpop.permute.xlu0 %1162
    %1164 = vrot.lane.b32.xlu0 %v1159, 32
    %v1165 = vpop.permute.xlu0 %1164
    %v1168 = vadd.f32 %v1148, %v1163
    %v1169 = vadd.f32 %v1149, %v1165
    %v1170 = vtanh.pop %v1168
    %v1171 = vtanh.pop %v1169
    %1174 = vrot.lane.b32.xlu0 %v1170, 32
    %v1175 = vpop.permute.xlu0 %1174
    %1176 = vrot.lane.b32.xlu0 %v1171, 32
    %v1177 = vpop.permute.xlu0 %1176
    %v1180 = vmul.f32 %v1143, %v1175
    %v1181 = vmul.f32 %v1145, %v1177
    %1184 = vrot.lane.b32.xlu0 %v1180, 64
    %v1185 = vpop.permute.xlu0 %1184
    %1186 = vrot.lane.b32.xlu0 %v1181, 64
    %v1187 = vpop.permute.xlu0 %1186
    %1190 = vst.msk [vmem:[#allocation2 + $0x50] sm:$0xff] %vm130, %v1185
    %1191 = vst.msk [vmem:[#allocation2 + $0x58] sm:$0xff] %vm130, %v1187
    %v1192 = vsel %vm130, %v1185, 0
    %v1194 = vsel %vm130, %v1187, 0
    %1196 = vmatprep.subr.mxu0 0.0
    %1197 = vmatpush1.msra.mxu0 0.0
    %1198 = vmatprep.subr.mxu0 0.0
    %1199 = vmatpush1.msra.mxu0 0.0
    %1200 = vmatprep.subr.mxu0 0.0
    %1201 = vmatpush1.msra.mxu0 0.0
    %1202 = vmatprep.subr.mxu0 0.0
    %1203 = vmatpush1.msra.mxu0 0.0
    %1204 = vmatprep.subr.mxu0 0.0
    %1205 = vmatpush1.msra.mxu0 0.0
    %1206 = vmatprep.subr.mxu0 0.0
    %1207 = vmatpush1.msra.mxu0 0.0
    %1208 = vmatprep.subr.mxu0 0.0
    %1209 = vmatpush1.msra.mxu0 0.0
    %1210 = vmatprep.subr.mxu0 0.0
    %1211 = vmatpush1.msra.mxu0 0.0
    %1212 = vmatprep.subr.mxu0 0.0
    %1213 = vmatpush1.msra.mxu0 0.0
    %1214 = vmatprep.subr.mxu0 0.0
    %1215 = vmatpush1.msra.mxu0 0.0
    %1216 = vmatprep.subr.mxu0 0.0
    %1217 = vmatpush1.msra.mxu0 0.0
    %1218 = vmatprep.subr.mxu0 0.0
    %1219 = vmatpush1.msra.mxu0 0.0
    %1220 = vmatprep.subr.mxu0 0.0
    %1221 = vmatpush1.msra.mxu0 %v358
    %1222 = vmatprep.subr.mxu0 0.0
    %1223 = vmatpush1.msra.mxu0 %v357
    %1224 = vmatprep.subr.mxu0 0.0
    %1225 = vmatpush1.msra.mxu0 %v356
    %1226 = vmatprep.subr.mxu0 0.0
    %1227 = vmatpush1.msra.mxu0 %v355
    %1228 = vmatprep.subr.mxu0 0.0
    %1229 = vmatpush2.msra.mxu0 0.0
    %1230 = vmatprep.subr.mxu0 0.0
    %1231 = vmatpush2.msra.mxu0 0.0
    %1232 = vmatprep.subr.mxu0 0.0
    %1233 = vmatpush2.msra.mxu0 0.0
    %1234 = vmatprep.subr.mxu0 0.0
    %1235 = vmatpush2.msra.mxu0 0.0
    %1236 = vmatprep.subr.mxu0 0.0
    %1237 = vmatpush2.msra.mxu0 0.0
    %1238 = vmatprep.subr.mxu0 0.0
    %1239 = vmatpush2.msra.mxu0 0.0
    %1240 = vmatprep.subr.mxu0 0.0
    %1241 = vmatpush2.msra.mxu0 0.0
    %1242 = vmatprep.subr.mxu0 0.0
    %1243 = vmatpush2.msra.mxu0 0.0
    %1244 = vmatprep.subr.mxu0 0.0
    %1245 = vmatpush2.msra.mxu0 0.0
    %1246 = vmatprep.subr.mxu0 0.0
    %1247 = vmatpush2.msra.mxu0 0.0
    %1248 = vmatprep.subr.mxu0 0.0
    %1249 = vmatpush2.msra.mxu0 0.0
    %1250 = vmatprep.subr.mxu0 0.0
    %1251 = vmatpush2.msra.mxu0 0.0
    %1252 = vmatprep.subr.mxu0 0.0
    %1253 = vmatpush2.msra.mxu0 0.0
    %1254 = vmatprep.subr.mxu0 0.0
    %1255 = vmatpush2.msra.mxu0 0.0
    %1256 = vmatprep.subr.mxu0 0.0
    %1257 = vmatpush2.msra.mxu0 0.0
    %1258 = vmatprep.subr.mxu0 0.0
    %1259 = vmatpush2.msra.mxu0 0.0
    %1260 = vmatprep.mubr.f32.mxu0 0.0
    %1261 = vmatmul.mubr.f32.gmra.mxu0 %v1192
    %v1262 = vpop.f32.mrf.mxu0
    %v1263 = vadd.f32 0.0, %v1262
    %v1264 = vpop.f32.mrf.mxu0
    %1265 = vmatprep.mubr.f32.mxu0 0.0
    %1266 = vmatmul.mubr.f32.gmra.mxu0 %v1194
    %v1267 = vpop.f32.mrf.mxu0
    %v1268 = vadd.f32 0.0, %v1267
    %v1269 = vpop.f32.mrf.mxu0
    %1270 = vdwg.mxu0
    %v1271 = vadd.f32 %v351, %v1263
    %v1272 = vadd.f32 %v352, %v1268
    %v1273 = vxor.u32 %v1271, 2147483648
    %v1274 = vxor.u32 %v1272, 2147483648
    %v1275 = vmul.f32 %v1273, 1.442695
    %v1276 = vpow.pop %v1275
    %v1277 = vmul.f32 %v1274, 1.442695
    %v1278 = vpow.pop %v1277
    %v1279 = vadd.f32 %v1276, 1.0
    %v1280 = vadd.f32 %v1278, 1.0
    %v1281 = vrcp.pop %v1279
    %v1282 = vmul.f32 1.0, %v1281
    %v1283 = vrcp.pop %v1280
    %v1284 = vmul.f32 1.0, %v1283
    %v1285 = vtanh.pop %v1271
    %v1286 = vtanh.pop %v1272
    %v1287 = vmul.f32 %v1282, %v1168
    %v1288 = vmul.f32 %v1284, %v1169
    %1291 = vrot.lane.b32.xlu0 %v1285, 32
    %v1292 = vpop.permute.xlu0 %1291
    %1293 = vrot.lane.b32.xlu0 %v1286, 32
    %v1294 = vpop.permute.xlu0 %1293
    %v1297 = vmul.f32 %v1282, %v1292
    %v1298 = vmul.f32 %v1284, %v1294
    %1301 = vrot.lane.b32.xlu0 %v1297, 32
    %v1302 = vpop.permute.xlu0 %1301
    %1303 = vrot.lane.b32.xlu0 %v1298, 32
    %v1304 = vpop.permute.xlu0 %1303
    %v1307 = vadd.f32 %v1287, %v1302
    %v1308 = vadd.f32 %v1288, %v1304
    %v1309 = vtanh.pop %v1307
    %v1310 = vtanh.pop %v1308
    %1313 = vrot.lane.b32.xlu0 %v1309, 32
    %v1314 = vpop.permute.xlu0 %1313
    %1315 = vrot.lane.b32.xlu0 %v1310, 32
    %v1316 = vpop.permute.xlu0 %1315
    %v1319 = vmul.f32 %v1282, %v1314
    %v1320 = vmul.f32 %v1284, %v1316
    %1323 = vrot.lane.b32.xlu0 %v1319, 64
    %v1324 = vpop.permute.xlu0 %1323
    %1325 = vrot.lane.b32.xlu0 %v1320, 64
    %v1326 = vpop.permute.xlu0 %1325
    %1329 = vst.msk [vmem:[#allocation2 + $0x60] sm:$0xff] %vm130, %v1324
    %1330 = vst.msk [vmem:[#allocation2 + $0x68] sm:$0xff] %vm130, %v1326
    %v1331 = vsel %vm130, %v1324, 0
    %v1333 = vsel %vm130, %v1326, 0
    %1335 = vmatprep.subr.mxu0 0.0
    %1336 = vmatpush1.msra.mxu0 0.0
    %1337 = vmatprep.subr.mxu0 0.0
    %1338 = vmatpush1.msra.mxu0 0.0
    %1339 = vmatprep.subr.mxu0 0.0
    %1340 = vmatpush1.msra.mxu0 0.0
    %1341 = vmatprep.subr.mxu0 0.0
    %1342 = vmatpush1.msra.mxu0 0.0
    %1343 = vmatprep.subr.mxu0 0.0
    %1344 = vmatpush1.msra.mxu0 0.0
    %1345 = vmatprep.subr.mxu0 0.0
    %1346 = vmatpush1.msra.mxu0 0.0
    %1347 = vmatprep.subr.mxu0 0.0
    %1348 = vmatpush1.msra.mxu0 0.0
    %1349 = vmatprep.subr.mxu0 0.0
    %1350 = vmatpush1.msra.mxu0 0.0
    %1351 = vmatprep.subr.mxu0 0.0
    %1352 = vmatpush1.msra.mxu0 0.0
    %1353 = vmatprep.subr.mxu0 0.0
    %1354 = vmatpush1.msra.mxu0 0.0
    %1355 = vmatprep.subr.mxu0 0.0
    %1356 = vmatpush1.msra.mxu0 0.0
    %1357 = vmatprep.subr.mxu0 0.0
    %1358 = vmatpush1.msra.mxu0 0.0
    %1359 = vmatprep.subr.mxu0 0.0
    %1360 = vmatpush1.msra.mxu0 %v358
    %1361 = vmatprep.subr.mxu0 0.0
    %1362 = vmatpush1.msra.mxu0 %v357
    %1363 = vmatprep.subr.mxu0 0.0
    %1364 = vmatpush1.msra.mxu0 %v356
    %1365 = vmatprep.subr.mxu0 0.0
    %1366 = vmatpush1.msra.mxu0 %v355
    %1367 = vmatprep.subr.mxu0 0.0
    %1368 = vmatpush2.msra.mxu0 0.0
    %1369 = vmatprep.subr.mxu0 0.0
    %1370 = vmatpush2.msra.mxu0 0.0
    %1371 = vmatprep.subr.mxu0 0.0
    %1372 = vmatpush2.msra.mxu0 0.0
    %1373 = vmatprep.subr.mxu0 0.0
    %1374 = vmatpush2.msra.mxu0 0.0
    %1375 = vmatprep.subr.mxu0 0.0
    %1376 = vmatpush2.msra.mxu0 0.0
    %1377 = vmatprep.subr.mxu0 0.0
    %1378 = vmatpush2.msra.mxu0 0.0
    %1379 = vmatprep.subr.mxu0 0.0
    %1380 = vmatpush2.msra.mxu0 0.0
    %1381 = vmatprep.subr.mxu0 0.0
    %1382 = vmatpush2.msra.mxu0 0.0
    %1383 = vmatprep.subr.mxu0 0.0
    %1384 = vmatpush2.msra.mxu0 0.0
    %1385 = vmatprep.subr.mxu0 0.0
    %1386 = vmatpush2.msra.mxu0 0.0
    %1387 = vmatprep.subr.mxu0 0.0
    %1388 = vmatpush2.msra.mxu0 0.0
    %1389 = vmatprep.subr.mxu0 0.0
    %1390 = vmatpush2.msra.mxu0 0.0
    %1391 = vmatprep.subr.mxu0 0.0
    %1392 = vmatpush2.msra.mxu0 0.0
    %1393 = vmatprep.subr.mxu0 0.0
    %1394 = vmatpush2.msra.mxu0 0.0
    %1395 = vmatprep.subr.mxu0 0.0
    %1396 = vmatpush2.msra.mxu0 0.0
    %1397 = vmatprep.subr.mxu0 0.0
    %1398 = vmatpush2.msra.mxu0 0.0
    %1399 = vmatprep.mubr.f32.mxu0 0.0
    %1400 = vmatmul.mubr.f32.gmra.mxu0 %v1331
    %v1401 = vpop.f32.mrf.mxu0
    %v1402 = vadd.f32 0.0, %v1401
    %v1403 = vpop.f32.mrf.mxu0
    %1404 = vmatprep.mubr.f32.mxu0 0.0
    %1405 = vmatmul.mubr.f32.gmra.mxu0 %v1333
    %v1406 = vpop.f32.mrf.mxu0
    %v1407 = vadd.f32 0.0, %v1406
    %v1408 = vpop.f32.mrf.mxu0
    %1409 = vdwg.mxu0
    %v1410 = vadd.f32 %v353, %v1402
    %v1411 = vadd.f32 %v354, %v1407
    %v1412 = vxor.u32 %v1410, 2147483648
    %v1413 = vxor.u32 %v1411, 2147483648
    %v1414 = vmul.f32 %v1412, 1.442695
    %v1415 = vpow.pop %v1414
    %v1416 = vmul.f32 %v1413, 1.442695
    %v1417 = vpow.pop %v1416
    %v1418 = vadd.f32 %v1415, 1.0
    %v1419 = vadd.f32 %v1417, 1.0
    %v1420 = vrcp.pop %v1418
    %v1421 = vmul.f32 1.0, %v1420
    %v1422 = vrcp.pop %v1419
    %v1423 = vmul.f32 1.0, %v1422
    %v1424 = vtanh.pop %v1410
    %v1425 = vtanh.pop %v1411
    %v1426 = vmul.f32 %v1421, %v1307
    %v1427 = vmul.f32 %v1423, %v1308
    %1430 = vrot.lane.b32.xlu0 %v1424, 32
    %v1431 = vpop.permute.xlu0 %1430
    %1432 = vrot.lane.b32.xlu0 %v1425, 32
    %v1433 = vpop.permute.xlu0 %1432
    %v1436 = vmul.f32 %v1421, %v1431
    %v1437 = vmul.f32 %v1423, %v1433
    %1440 = vrot.lane.b32.xlu0 %v1436, 32
    %v1441 = vpop.permute.xlu0 %1440
    %1442 = vrot.lane.b32.xlu0 %v1437, 32
    %v1443 = vpop.permute.xlu0 %1442
    %v1446 = vadd.f32 %v1426, %v1441
    %v1447 = vadd.f32 %v1427, %v1443
    %v1448 = vtanh.pop %v1446
    %v1449 = vtanh.pop %v1447
    %1452 = vrot.lane.b32.xlu0 %v1448, 32
    %v1453 = vpop.permute.xlu0 %1452
    %1454 = vrot.lane.b32.xlu0 %v1449, 32
    %v1455 = vpop.permute.xlu0 %1454
    %v1458 = vmul.f32 %v1421, %v1453
    %v1459 = vmul.f32 %v1423, %v1455
    %1462 = vrot.lane.b32.xlu0 %v1458, 64
    %v1463 = vpop.permute.xlu0 %1462
    %1464 = vrot.lane.b32.xlu0 %v1459, 64
    %v1465 = vpop.permute.xlu0 %1464
    %1468 = vst.msk [vmem:[#allocation2 + $0x70] sm:$0xff] %vm130, %v1463
    %1469 = vst.msk [vmem:[#allocation2 + $0x78] sm:$0xff] %vm130, %v1465
    %v1470 = vld [vmem:[#allocation7] sm:$0xff]
    %v1471 = vld [vmem:[#allocation7 + $0x8] sm:$0xff]
    %v1472 = vld [vmem:[#allocation8] sm:$0xff]
    %v1473 = vld [vmem:[#allocation8 + $0x8] sm:$0xff]
    %v1474 = vld [vmem:[#allocation10] sm:$0xff]
    %v1475 = vld [vmem:[#allocation10 + $0x8] sm:$0xff]
    %v1476 = vld [vmem:[#allocation10 + $0x10] sm:$0xff]
    %v1477 = vld [vmem:[#allocation10 + $0x18] sm:$0xff]
    %v1478 = vld [vmem:[%s7] sm:$0x1]
    %v1479 = vld [vmem:[#allocation2] sm:$0xff]
    %v1480 = vld [vmem:[#allocation2 + $0x8] sm:$0xff]
    %v1481 = vld [vmem:[#allocation2 + $0x10] sm:$0xff]
    %v1482 = vld [vmem:[#allocation2 + $0x18] sm:$0xff]
    %v1483 = vld [vmem:[#allocation2 + $0x20] sm:$0xff]
    %v1484 = vld [vmem:[#allocation2 + $0x28] sm:$0xff]
    %v1485 = vld [vmem:[#allocation2 + $0x30] sm:$0xff]
    %v1486 = vld [vmem:[#allocation2 + $0x38] sm:$0xff]
    %v1487 = vld [vmem:[#allocation2 + $0x40] sm:$0xff]
    %v1488 = vld [vmem:[#allocation2 + $0x48] sm:$0xff]
    %v1489 = vld [vmem:[#allocation2 + $0x50] sm:$0xff]
    %v1490 = vld [vmem:[#allocation2 + $0x58] sm:$0xff]
    %v1491 = vld [vmem:[#allocation2 + $0x60] sm:$0xff]
    %v1492 = vld [vmem:[#allocation2 + $0x68] sm:$0xff]
    %v1493 = vld [vmem:[#allocation2 + $0x70] sm:$0xff]
    %v1494 = vld [vmem:[#allocation2 + $0x78] sm:$0xff]
    %1511 = vrot.lane.b32.xlu0 %v1493, 112
    %v1512 = vpop.permute.xlu0 %1511
    %1513 = vrot.lane.b32.xlu0 %v1494, 112
    %v1514 = vpop.permute.xlu0 %1513
    %1515 = vrot.lane.b32.xlu0 %v1491, 112
    %v1516 = vpop.permute.xlu0 %1515
    %1517 = vrot.lane.b32.xlu0 %v1492, 112
    %v1518 = vpop.permute.xlu0 %1517
    %1519 = vrot.lane.b32.xlu0 %v1489, 112
    %v1520 = vpop.permute.xlu0 %1519
    %1521 = vrot.lane.b32.xlu0 %v1490, 112
    %v1522 = vpop.permute.xlu0 %1521
    %1523 = vrot.lane.b32.xlu0 %v1487, 112
    %v1524 = vpop.permute.xlu0 %1523
    %1525 = vrot.lane.b32.xlu0 %v1488, 112
    %v1526 = vpop.permute.xlu0 %1525
    %1527 = vrot.lane.b32.xlu0 %v1485, 112
    %v1528 = vpop.permute.xlu0 %1527
    %1529 = vrot.lane.b32.xlu0 %v1486, 112
    %v1530 = vpop.permute.xlu0 %1529
    %1531 = vrot.lane.b32.xlu0 %v1483, 112
    %v1532 = vpop.permute.xlu0 %1531
    %1533 = vrot.lane.b32.xlu0 %v1484, 112
    %v1534 = vpop.permute.xlu0 %1533
    %1535 = vrot.lane.b32.xlu0 %v1481, 112
    %v1536 = vpop.permute.xlu0 %1535
    %1537 = vrot.lane.b32.xlu0 %v1482, 112
    %v1538 = vpop.permute.xlu0 %1537
    %1539 = vrot.lane.b32.xlu0 %v1479, 112
    %v1540 = vpop.permute.xlu0 %1539
    %1541 = vrot.lane.b32.xlu0 %v1480, 112
    %v1542 = vpop.permute.xlu0 %1541
    %vm1543 = vcmask 130048
    %v1544 = vsel %vm1543, %v1512, 0
    %v1546 = vsel %vm1543, %v1514, 0
    %v1548 = vsel %vm1543, %v1516, 0
    %v1550 = vsel %vm1543, %v1518, 0
    %v1552 = vsel %vm1543, %v1520, 0
    %v1554 = vsel %vm1543, %v1522, 0
    %v1556 = vsel %vm1543, %v1524, 0
    %v1558 = vsel %vm1543, %v1526, 0
    %v1560 = vsel %vm1543, %v1528, 0
    %v1562 = vsel %vm1543, %v1530, 0
    %v1564 = vsel %vm1543, %v1532, 0
    %v1566 = vsel %vm1543, %v1534, 0
    %v1568 = vsel %vm1543, %v1536, 0
    %v1570 = vsel %vm1543, %v1538, 0
    %v1572 = vsel %vm1543, %v1540, 0
    %v1574 = vsel %vm1543, %v1542, 0
    %1576 = vmatprep.subr.mxu0 0.0
    %1577 = vmatpush1.msra.mxu0 0.0
    %1578 = vmatprep.subr.mxu0 0.0
    %1579 = vmatpush1.msra.mxu0 0.0
    %1580 = vmatprep.subr.mxu0 0.0
    %1581 = vmatpush1.msra.mxu0 0.0
    %1582 = vmatprep.subr.mxu0 0.0
    %1583 = vmatpush1.msra.mxu0 0.0
    %1584 = vmatprep.subr.mxu0 0.0
    %1585 = vmatpush1.msra.mxu0 0.0
    %1586 = vmatprep.subr.mxu0 0.0
    %1587 = vmatpush1.msra.mxu0 0.0
    %1588 = vmatprep.subr.mxu0 0.0
    %1589 = vmatpush1.msra.mxu0 0.0
    %1590 = vmatprep.subr.mxu0 0.0
    %1591 = vmatpush1.msra.mxu0 0.0
    %1592 = vmatprep.subr.mxu0 0.0
    %1593 = vmatpush1.msra.mxu0 0.0
    %1594 = vmatprep.subr.mxu0 0.0
    %1595 = vmatpush1.msra.mxu0 0.0
    %1596 = vmatprep.subr.mxu0 0.0
    %1597 = vmatpush1.msra.mxu0 0.0
    %1598 = vmatprep.subr.mxu0 0.0
    %1599 = vmatpush1.msra.mxu0 0.0
    %1600 = vmatprep.subr.mxu0 0.0
    %1601 = vmatpush1.msra.mxu0 0.0
    %1602 = vmatprep.subr.mxu0 0.0
    %1603 = vmatpush1.msra.mxu0 0.0
    %1604 = vmatprep.subr.mxu0 0.0
    %1605 = vmatpush1.msra.mxu0 %v1473
    %1606 = vmatprep.subr.mxu0 0.0
    %1607 = vmatpush1.msra.mxu0 %v1472
    %1608 = vmatprep.subr.mxu0 0.0
    %1609 = vmatpush2.msra.mxu0 0.0
    %1610 = vmatprep.subr.mxu0 0.0
    %1611 = vmatpush2.msra.mxu0 0.0
    %1612 = vmatprep.subr.mxu0 0.0
    %1613 = vmatpush2.msra.mxu0 0.0
    %1614 = vmatprep.subr.mxu0 0.0
    %1615 = vmatpush2.msra.mxu0 0.0
    %1616 = vmatprep.subr.mxu0 0.0
    %1617 = vmatpush2.msra.mxu0 0.0
    %1618 = vmatprep.subr.mxu0 0.0
    %1619 = vmatpush2.msra.mxu0 0.0
    %1620 = vmatprep.subr.mxu0 0.0
    %1621 = vmatpush2.msra.mxu0 0.0
    %1622 = vmatprep.subr.mxu0 0.0
    %1623 = vmatpush2.msra.mxu0 0.0
    %1624 = vmatprep.subr.mxu0 0.0
    %1625 = vmatpush2.msra.mxu0 0.0
    %1626 = vmatprep.subr.mxu0 0.0
    %1627 = vmatpush2.msra.mxu0 0.0
    %1628 = vmatprep.subr.mxu0 0.0
    %1629 = vmatpush2.msra.mxu0 0.0
    %1630 = vmatprep.subr.mxu0 0.0
    %1631 = vmatpush2.msra.mxu0 0.0
    %1632 = vmatprep.subr.mxu0 0.0
    %1633 = vmatpush2.msra.mxu0 0.0
    %1634 = vmatprep.subr.mxu0 0.0
    %1635 = vmatpush2.msra.mxu0 0.0
    %1636 = vmatprep.subr.mxu0 0.0
    %1637 = vmatpush2.msra.mxu0 0.0
    %1638 = vmatprep.subr.mxu0 0.0
    %1639 = vmatpush2.msra.mxu0 0.0
    %1640 = vmatprep.mubr.f32.mxu0 0.0
    %1641 = vmatmul.mubr.f32.gmra.mxu0 %v1544
    %v1642 = vpop.f32.mrf.mxu0
    %v1643 = vadd.f32 0.0, %v1642
    %v1644 = vpop.f32.mrf.mxu0
    %1645 = vmatprep.mubr.f32.mxu0 0.0
    %1646 = vmatmul.mubr.f32.gmra.mxu0 %v1546
    %v1647 = vpop.f32.mrf.mxu0
    %v1648 = vadd.f32 0.0, %v1647
    %v1649 = vpop.f32.mrf.mxu0
    %1650 = vmatprep.mubr.f32.mxu0 0.0
    %1651 = vmatmul.mubr.f32.gmra.mxu0 %v1548
    %v1652 = vpop.f32.mrf.mxu0
    %v1653 = vadd.f32 0.0, %v1652
    %v1654 = vpop.f32.mrf.mxu0
    %1655 = vmatprep.mubr.f32.mxu0 0.0
    %1656 = vmatmul.mubr.f32.gmra.mxu0 %v1550
    %v1657 = vpop.f32.mrf.mxu0
    %v1658 = vadd.f32 0.0, %v1657
    %v1659 = vpop.f32.mrf.mxu0
    %1660 = vmatprep.mubr.f32.mxu0 0.0
    %1661 = vmatmul.mubr.f32.gmra.mxu0 %v1552
    %v1662 = vpop.f32.mrf.mxu0
    %v1663 = vadd.f32 0.0, %v1662
    %v1664 = vpop.f32.mrf.mxu0
    %1665 = vmatprep.mubr.f32.mxu0 0.0
    %1666 = vmatmul.mubr.f32.gmra.mxu0 %v1554
    %v1667 = vpop.f32.mrf.mxu0
    %v1668 = vadd.f32 0.0, %v1667
    %v1669 = vpop.f32.mrf.mxu0
    %1670 = vmatprep.mubr.f32.mxu0 0.0
    %1671 = vmatmul.mubr.f32.gmra.mxu0 %v1556
    %v1672 = vpop.f32.mrf.mxu0
    %v1673 = vadd.f32 0.0, %v1672
    %v1674 = vpop.f32.mrf.mxu0
    %1675 = vmatprep.mubr.f32.mxu0 0.0
    %1676 = vmatmul.mubr.f32.gmra.mxu0 %v1558
    %v1677 = vpop.f32.mrf.mxu0
    %v1678 = vadd.f32 0.0, %v1677
    %v1679 = vpop.f32.mrf.mxu0
    %1680 = vmatprep.mubr.f32.mxu0 0.0
    %1681 = vmatmul.mubr.f32.gmra.mxu0 %v1560
    %v1682 = vpop.f32.mrf.mxu0
    %v1683 = vadd.f32 0.0, %v1682
    %v1684 = vpop.f32.mrf.mxu0
    %1685 = vmatprep.mubr.f32.mxu0 0.0
    %1686 = vmatmul.mubr.f32.gmra.mxu0 %v1562
    %v1687 = vpop.f32.mrf.mxu0
    %v1688 = vadd.f32 0.0, %v1687
    %v1689 = vpop.f32.mrf.mxu0
    %1690 = vmatprep.mubr.f32.mxu0 0.0
    %1691 = vmatmul.mubr.f32.gmra.mxu0 %v1564
    %v1692 = vpop.f32.mrf.mxu0
    %v1693 = vadd.f32 0.0, %v1692
    %v1694 = vpop.f32.mrf.mxu0
    %1695 = vmatprep.mubr.f32.mxu0 0.0
    %1696 = vmatmul.mubr.f32.gmra.mxu0 %v1566
    %v1697 = vpop.f32.mrf.mxu0
    %v1698 = vadd.f32 0.0, %v1697
    %v1699 = vpop.f32.mrf.mxu0
    %1700 = vmatprep.mubr.f32.mxu0 0.0
    %1701 = vmatmul.mubr.f32.gmra.mxu0 %v1568
    %v1702 = vpop.f32.mrf.mxu0
    %v1703 = vadd.f32 0.0, %v1702
    %v1704 = vpop.f32.mrf.mxu0
    %1705 = vmatprep.mubr.f32.mxu0 0.0
    %1706 = vmatmul.mubr.f32.gmra.mxu0 %v1570
    %v1707 = vpop.f32.mrf.mxu0
    %v1708 = vadd.f32 0.0, %v1707
    %v1709 = vpop.f32.mrf.mxu0
    %1710 = vmatprep.mubr.f32.mxu0 0.0
    %1711 = vmatmul.mubr.f32.gmra.mxu0 %v1572
    %v1712 = vpop.f32.mrf.mxu0
    %v1713 = vadd.f32 0.0, %v1712
    %v1714 = vpop.f32.mrf.mxu0
    %1715 = vmatprep.mubr.f32.mxu0 0.0
    %1716 = vmatmul.mubr.f32.gmra.mxu0 %v1574
    %v1717 = vpop.f32.mrf.mxu0
    %v1718 = vadd.f32 0.0, %v1717
    %v1719 = vpop.f32.mrf.mxu0
    %1720 = vdwg.mxu0
    %v1721 = vsel %vm1543, %v1479, 0
    %v1723 = vsel %vm1543, %v1480, 0
    %v1725 = vsel %vm1543, %v1481, 0
    %v1727 = vsel %vm1543, %v1482, 0
    %v1729 = vsel %vm1543, %v1483, 0
    %v1731 = vsel %vm1543, %v1484, 0
    %v1733 = vsel %vm1543, %v1485, 0
    %v1735 = vsel %vm1543, %v1486, 0
    %v1737 = vsel %vm1543, %v1487, 0
    %v1739 = vsel %vm1543, %v1488, 0
    %v1741 = vsel %vm1543, %v1489, 0
    %v1743 = vsel %vm1543, %v1490, 0
    %v1745 = vsel %vm1543, %v1491, 0
    %v1747 = vsel %vm1543, %v1492, 0
    %v1749 = vsel %vm1543, %v1493, 0
    %v1751 = vsel %vm1543, %v1494, 0
    %1753 = vmatprep.subr.mxu0 0.0
    %1754 = vmatpush1.msra.mxu0 0.0
    %1755 = vmatprep.subr.mxu0 0.0
    %1756 = vmatpush1.msra.mxu0 0.0
    %1757 = vmatprep.subr.mxu0 0.0
    %1758 = vmatpush1.msra.mxu0 0.0
    %1759 = vmatprep.subr.mxu0 0.0
    %1760 = vmatpush1.msra.mxu0 0.0
    %1761 = vmatprep.subr.mxu0 0.0
    %1762 = vmatpush1.msra.mxu0 0.0
    %1763 = vmatprep.subr.mxu0 0.0
    %1764 = vmatpush1.msra.mxu0 0.0
    %1765 = vmatprep.subr.mxu0 0.0
    %1766 = vmatpush1.msra.mxu0 0.0
    %1767 = vmatprep.subr.mxu0 0.0
    %1768 = vmatpush1.msra.mxu0 0.0
    %1769 = vmatprep.subr.mxu0 0.0
    %1770 = vmatpush1.msra.mxu0 0.0
    %1771 = vmatprep.subr.mxu0 0.0
    %1772 = vmatpush1.msra.mxu0 0.0
    %1773 = vmatprep.subr.mxu0 0.0
    %1774 = vmatpush1.msra.mxu0 0.0
    %1775 = vmatprep.subr.mxu0 0.0
    %1776 = vmatpush1.msra.mxu0 0.0
    %1777 = vmatprep.subr.mxu0 0.0
    %1778 = vmatpush1.msra.mxu0 0.0
    %1779 = vmatprep.subr.mxu0 0.0
    %1780 = vmatpush1.msra.mxu0 0.0
    %1781 = vmatprep.subr.mxu0 0.0
    %1782 = vmatpush1.msra.mxu0 %v1471
    %1783 = vmatprep.subr.mxu0 0.0
    %1784 = vmatpush1.msra.mxu0 %v1470
    %1785 = vmatprep.subr.mxu0 0.0
    %1786 = vmatpush2.msra.mxu0 0.0
    %1787 = vmatprep.subr.mxu0 0.0
    %1788 = vmatpush2.msra.mxu0 0.0
    %1789 = vmatprep.subr.mxu0 0.0
    %1790 = vmatpush2.msra.mxu0 0.0
    %1791 = vmatprep.subr.mxu0 0.0
    %1792 = vmatpush2.msra.mxu0 0.0
    %1793 = vmatprep.subr.mxu0 0.0
    %1794 = vmatpush2.msra.mxu0 0.0
    %1795 = vmatprep.subr.mxu0 0.0
    %1796 = vmatpush2.msra.mxu0 0.0
    %1797 = vmatprep.subr.mxu0 0.0
    %1798 = vmatpush2.msra.mxu0 0.0
    %1799 = vmatprep.subr.mxu0 0.0
    %1800 = vmatpush2.msra.mxu0 0.0
    %1801 = vmatprep.subr.mxu0 0.0
    %1802 = vmatpush2.msra.mxu0 0.0
    %1803 = vmatprep.subr.mxu0 0.0
    %1804 = vmatpush2.msra.mxu0 0.0
    %1805 = vmatprep.subr.mxu0 0.0
    %1806 = vmatpush2.msra.mxu0 0.0
    %1807 = vmatprep.subr.mxu0 0.0
    %1808 = vmatpush2.msra.mxu0 0.0
    %1809 = vmatprep.subr.mxu0 0.0
    %1810 = vmatpush2.msra.mxu0 0.0
    %1811 = vmatprep.subr.mxu0 0.0
    %1812 = vmatpush2.msra.mxu0 0.0
    %1813 = vmatprep.subr.mxu0 0.0
    %1814 = vmatpush2.msra.mxu0 0.0
    %1815 = vmatprep.subr.mxu0 0.0
    %1816 = vmatpush2.msra.mxu0 0.0
    %1817 = vmatprep.mubr.f32.mxu0 0.0
    %1818 = vmatmul.mubr.f32.gmra.mxu0 %v1721
    %v1819 = vpop.f32.mrf.mxu0
    %v1820 = vadd.f32 %v1643, %v1819
    %v1821 = vpop.f32.mrf.mxu0
    %1822 = vmatprep.mubr.f32.mxu0 0.0
    %1823 = vmatmul.mubr.f32.gmra.mxu0 %v1723
    %v1824 = vpop.f32.mrf.mxu0
    %v1825 = vadd.f32 %v1648, %v1824
    %v1826 = vpop.f32.mrf.mxu0
    %1827 = vmatprep.mubr.f32.mxu0 0.0
    %1828 = vmatmul.mubr.f32.gmra.mxu0 %v1725
    %v1829 = vpop.f32.mrf.mxu0
    %v1830 = vadd.f32 %v1653, %v1829
    %v1831 = vpop.f32.mrf.mxu0
    %1832 = vmatprep.mubr.f32.mxu0 0.0
    %1833 = vmatmul.mubr.f32.gmra.mxu0 %v1727
    %v1834 = vpop.f32.mrf.mxu0
    %v1835 = vadd.f32 %v1658, %v1834
    %v1836 = vpop.f32.mrf.mxu0
    %1837 = vmatprep.mubr.f32.mxu0 0.0
    %1838 = vmatmul.mubr.f32.gmra.mxu0 %v1729
    %v1839 = vpop.f32.mrf.mxu0
    %v1840 = vadd.f32 %v1663, %v1839
    %v1841 = vpop.f32.mrf.mxu0
    %1842 = vmatprep.mubr.f32.mxu0 0.0
    %1843 = vmatmul.mubr.f32.gmra.mxu0 %v1731
    %v1844 = vpop.f32.mrf.mxu0
    %v1845 = vadd.f32 %v1668, %v1844
    %v1846 = vpop.f32.mrf.mxu0
    %1847 = vmatprep.mubr.f32.mxu0 0.0
    %1848 = vmatmul.mubr.f32.gmra.mxu0 %v1733
    %v1849 = vpop.f32.mrf.mxu0
    %v1850 = vadd.f32 %v1673, %v1849
    %v1851 = vpop.f32.mrf.mxu0
    %1852 = vmatprep.mubr.f32.mxu0 0.0
    %1853 = vmatmul.mubr.f32.gmra.mxu0 %v1735
    %v1854 = vpop.f32.mrf.mxu0
    %v1855 = vadd.f32 %v1678, %v1854
    %v1856 = vpop.f32.mrf.mxu0
    %1857 = vmatprep.mubr.f32.mxu0 0.0
    %1858 = vmatmul.mubr.f32.gmra.mxu0 %v1737
    %v1859 = vpop.f32.mrf.mxu0
    %v1860 = vadd.f32 %v1683, %v1859
    %v1861 = vpop.f32.mrf.mxu0
    %1862 = vmatprep.mubr.f32.mxu0 0.0
    %1863 = vmatmul.mubr.f32.gmra.mxu0 %v1739
    %v1864 = vpop.f32.mrf.mxu0
    %v1865 = vadd.f32 %v1688, %v1864
    %v1866 = vpop.f32.mrf.mxu0
    %1867 = vmatprep.mubr.f32.mxu0 0.0
    %1868 = vmatmul.mubr.f32.gmra.mxu0 %v1741
    %v1869 = vpop.f32.mrf.mxu0
    %v1870 = vadd.f32 %v1693, %v1869
    %v1871 = vpop.f32.mrf.mxu0
    %1872 = vmatprep.mubr.f32.mxu0 0.0
    %1873 = vmatmul.mubr.f32.gmra.mxu0 %v1743
    %v1874 = vpop.f32.mrf.mxu0
    %v1875 = vadd.f32 %v1698, %v1874
    %v1876 = vpop.f32.mrf.mxu0
    %1877 = vmatprep.mubr.f32.mxu0 0.0
    %1878 = vmatmul.mubr.f32.gmra.mxu0 %v1745
    %v1879 = vpop.f32.mrf.mxu0
    %v1880 = vadd.f32 %v1703, %v1879
    %v1881 = vpop.f32.mrf.mxu0
    %1882 = vmatprep.mubr.f32.mxu0 0.0
    %1883 = vmatmul.mubr.f32.gmra.mxu0 %v1747
    %v1884 = vpop.f32.mrf.mxu0
    %v1885 = vadd.f32 %v1708, %v1884
    %v1886 = vpop.f32.mrf.mxu0
    %1887 = vmatprep.mubr.f32.mxu0 0.0
    %1888 = vmatmul.mubr.f32.gmra.mxu0 %v1749
    %v1889 = vpop.f32.mrf.mxu0
    %v1890 = vadd.f32 %v1713, %v1889
    %v1891 = vpop.f32.mrf.mxu0
    %1892 = vmatprep.mubr.f32.mxu0 0.0
    %1893 = vmatmul.mubr.f32.gmra.mxu0 %v1751
    %v1894 = vpop.f32.mrf.mxu0
    %v1895 = vadd.f32 %v1718, %v1894
    %v1896 = vpop.f32.mrf.mxu0
    %1897 = vdwg.mxu0
    %1898 = vmatprep.subr.mxu0 0.0
    %1899 = vmatpush1.msra.mxu0 0.0
    %1900 = vmatprep.subr.mxu0 0.0
    %1901 = vmatpush1.msra.mxu0 0.0
    %1902 = vmatprep.subr.mxu0 0.0
    %1903 = vmatpush1.msra.mxu0 0.0
    %1904 = vmatprep.subr.mxu0 0.0
    %1905 = vmatpush1.msra.mxu0 0.0
    %1906 = vmatprep.subr.mxu0 0.0
    %1907 = vmatpush1.msra.mxu0 0.0
    %1908 = vmatprep.subr.mxu0 0.0
    %1909 = vmatpush1.msra.mxu0 0.0
    %1910 = vmatprep.subr.mxu0 0.0
    %1911 = vmatpush1.msra.mxu0 0.0
    %1912 = vmatprep.subr.mxu0 0.0
    %1913 = vmatpush1.msra.mxu0 0.0
    %1914 = vmatprep.subr.mxu0 0.0
    %1915 = vmatpush1.msra.mxu0 0.0
    %1916 = vmatprep.subr.mxu0 0.0
    %1917 = vmatpush1.msra.mxu0 0.0
    %1918 = vmatprep.subr.mxu0 0.0
    %1919 = vmatpush1.msra.mxu0 0.0
    %1920 = vmatprep.subr.mxu0 0.0
    %1921 = vmatpush1.msra.mxu0 0.0
    %1922 = vmatprep.subr.mxu0 0.0
    %1923 = vmatpush1.msra.mxu0 %v1477
    %1924 = vmatprep.subr.mxu0 0.0
    %1925 = vmatpush1.msra.mxu0 %v1476
    %1926 = vmatprep.subr.mxu0 0.0
    %1927 = vmatpush1.msra.mxu0 %v1475
    %1928 = vmatprep.subr.mxu0 0.0
    %1929 = vmatpush1.msra.mxu0 %v1474
    %1930 = vmatprep.subr.mxu0 0.0
    %1931 = vmatpush2.msra.mxu0 0.0
    %1932 = vmatprep.subr.mxu0 0.0
    %1933 = vmatpush2.msra.mxu0 0.0
    %1934 = vmatprep.subr.mxu0 0.0
    %1935 = vmatpush2.msra.mxu0 0.0
    %1936 = vmatprep.subr.mxu0 0.0
    %1937 = vmatpush2.msra.mxu0 0.0
    %1938 = vmatprep.subr.mxu0 0.0
    %1939 = vmatpush2.msra.mxu0 0.0
    %1940 = vmatprep.subr.mxu0 0.0
    %1941 = vmatpush2.msra.mxu0 0.0
    %1942 = vmatprep.subr.mxu0 0.0
    %1943 = vmatpush2.msra.mxu0 0.0
    %1944 = vmatprep.subr.mxu0 0.0
    %1945 = vmatpush2.msra.mxu0 0.0
    %1946 = vmatprep.subr.mxu0 0.0
    %1947 = vmatpush2.msra.mxu0 0.0
    %1948 = vmatprep.subr.mxu0 0.0
    %1949 = vmatpush2.msra.mxu0 0.0
    %1950 = vmatprep.subr.mxu0 0.0
    %1951 = vmatpush2.msra.mxu0 0.0
    %1952 = vmatprep.subr.mxu0 0.0
    %1953 = vmatpush2.msra.mxu0 0.0
    %1954 = vmatprep.subr.mxu0 0.0
    %1955 = vmatpush2.msra.mxu0 0.0
    %1956 = vmatprep.subr.mxu0 0.0
    %1957 = vmatpush2.msra.mxu0 0.0
    %1958 = vmatprep.subr.mxu0 0.0
    %1959 = vmatpush2.msra.mxu0 0.0
    %1960 = vmatprep.subr.mxu0 0.0
    %1961 = vmatpush2.msra.mxu0 0.0
    %1962 = vmatprep.mubr.f32.mxu0 0.0
    %1963 = vmatmul.mubr.f32.gmra.mxu0 %v132
    %v1964 = vpop.f32.mrf.mxu0
    %v1965 = vadd.f32 0.0, %v1964
    %v1966 = vpop.f32.mrf.mxu0
    %1967 = vmatprep.mubr.f32.mxu0 0.0
    %1968 = vmatmul.mubr.f32.gmra.mxu0 %v135
    %v1969 = vpop.f32.mrf.mxu0
    %v1970 = vadd.f32 0.0, %v1969
    %v1971 = vpop.f32.mrf.mxu0
    %1972 = vmatprep.mubr.f32.mxu0 0.0
    %1973 = vmatmul.mubr.f32.gmra.mxu0 %v138
    %v1974 = vpop.f32.mrf.mxu0
    %v1975 = vadd.f32 0.0, %v1974
    %v1976 = vpop.f32.mrf.mxu0
    %1977 = vmatprep.mubr.f32.mxu0 0.0
    %1978 = vmatmul.mubr.f32.gmra.mxu0 %v141
    %v1979 = vpop.f32.mrf.mxu0
    %v1980 = vadd.f32 0.0, %v1979
    %v1981 = vpop.f32.mrf.mxu0
    %1982 = vmatprep.mubr.f32.mxu0 0.0
    %1983 = vmatmul.mubr.f32.gmra.mxu0 %v144
    %v1984 = vpop.f32.mrf.mxu0
    %v1985 = vadd.f32 0.0, %v1984
    %v1986 = vpop.f32.mrf.mxu0
    %1987 = vmatprep.mubr.f32.mxu0 0.0
    %1988 = vmatmul.mubr.f32.gmra.mxu0 %v147
    %v1989 = vpop.f32.mrf.mxu0
    %v1990 = vadd.f32 0.0, %v1989
    %v1991 = vpop.f32.mrf.mxu0
    %1992 = vmatprep.mubr.f32.mxu0 0.0
    %1993 = vmatmul.mubr.f32.gmra.mxu0 %v150
    %v1994 = vpop.f32.mrf.mxu0
    %v1995 = vadd.f32 0.0, %v1994
    %v1996 = vpop.f32.mrf.mxu0
    %1997 = vmatprep.mubr.f32.mxu0 0.0
    %1998 = vmatmul.mubr.f32.gmra.mxu0 %v153
    %v1999 = vpop.f32.mrf.mxu0
    %v2000 = vadd.f32 0.0, %v1999
    %v2001 = vpop.f32.mrf.mxu0
    %2002 = vmatprep.mubr.f32.mxu0 0.0
    %2003 = vmatmul.mubr.f32.gmra.mxu0 %v156
    %v2004 = vpop.f32.mrf.mxu0
    %v2005 = vadd.f32 0.0, %v2004
    %v2006 = vpop.f32.mrf.mxu0
    %2007 = vmatprep.mubr.f32.mxu0 0.0
    %2008 = vmatmul.mubr.f32.gmra.mxu0 %v159
    %v2009 = vpop.f32.mrf.mxu0
    %v2010 = vadd.f32 0.0, %v2009
    %v2011 = vpop.f32.mrf.mxu0
    %2012 = vmatprep.mubr.f32.mxu0 0.0
    %2013 = vmatmul.mubr.f32.gmra.mxu0 %v162
    %v2014 = vpop.f32.mrf.mxu0
    %v2015 = vadd.f32 0.0, %v2014
    %v2016 = vpop.f32.mrf.mxu0
    %2017 = vmatprep.mubr.f32.mxu0 0.0
    %2018 = vmatmul.mubr.f32.gmra.mxu0 %v165
    %v2019 = vpop.f32.mrf.mxu0
    %v2020 = vadd.f32 0.0, %v2019
    %v2021 = vpop.f32.mrf.mxu0
    %2022 = vmatprep.mubr.f32.mxu0 0.0
    %2023 = vmatmul.mubr.f32.gmra.mxu0 %v168
    %v2024 = vpop.f32.mrf.mxu0
    %v2025 = vadd.f32 0.0, %v2024
    %v2026 = vpop.f32.mrf.mxu0
    %2027 = vmatprep.mubr.f32.mxu0 0.0
    %2028 = vmatmul.mubr.f32.gmra.mxu0 %v171
    %v2029 = vpop.f32.mrf.mxu0
    %v2030 = vadd.f32 0.0, %v2029
    %v2031 = vpop.f32.mrf.mxu0
    %2032 = vmatprep.mubr.f32.mxu0 0.0
    %2033 = vmatmul.mubr.f32.gmra.mxu0 %v174
    %v2034 = vpop.f32.mrf.mxu0
    %v2035 = vadd.f32 0.0, %v2034
    %v2036 = vpop.f32.mrf.mxu0
    %2037 = vmatprep.mubr.f32.mxu0 0.0
    %2038 = vmatmul.mubr.f32.gmra.mxu0 %v177
    %v2039 = vpop.f32.mrf.mxu0
    %v2040 = vadd.f32 0.0, %v2039
    %v2041 = vpop.f32.mrf.mxu0
    %2042 = vdwg.mxu0
    %v2043 = vadd.f32 %v1820, %v1965
    %v2044 = vadd.f32 %v1825, %v1970
    %v2045 = vadd.f32 %v1830, %v1975
    %v2046 = vadd.f32 %v1835, %v1980
    %v2047 = vadd.f32 %v1840, %v1985
    %v2048 = vadd.f32 %v1845, %v1990
    %v2049 = vadd.f32 %v1850, %v1995
    %v2050 = vadd.f32 %v1855, %v2000
    %v2051 = vadd.f32 %v1860, %v2005
    %v2052 = vadd.f32 %v1865, %v2010
    %v2053 = vadd.f32 %v1870, %v2015
    %v2054 = vadd.f32 %v1875, %v2020
    %v2055 = vadd.f32 %v1880, %v2025
    %v2056 = vadd.f32 %v1885, %v2030
    %v2057 = vadd.f32 %v1890, %v2035
    %v2058 = vadd.f32 %v1895, %v2040
    %v2060 = vlaneseq
    %v2061 = vshrl.u32 %v2060, 7
    %v2062 = vsub.s32 0, %v2061
    %v2063 = vrot.slane %v1478, %v2062
    %v2065 = vadd.f32 %v2043, %v2063
    %v2066 = vadd.f32 %v2044, %v2063
    %v2067 = vadd.f32 %v2045, %v2063
    %v2068 = vadd.f32 %v2046, %v2063
    %v2069 = vadd.f32 %v2047, %v2063
    %v2070 = vadd.f32 %v2048, %v2063
    %v2071 = vadd.f32 %v2049, %v2063
    %v2072 = vadd.f32 %v2050, %v2063
    %v2073 = vadd.f32 %v2051, %v2063
    %v2074 = vadd.f32 %v2052, %v2063
    %v2075 = vadd.f32 %v2053, %v2063
    %v2076 = vadd.f32 %v2054, %v2063
    %v2077 = vadd.f32 %v2055, %v2063
    %v2078 = vadd.f32 %v2056, %v2063
    %v2079 = vadd.f32 %v2057, %v2063
    %v2080 = vadd.f32 %v2058, %v2063
    %v2081 = vtanh.pop %v2065
    %v2082 = vtanh.pop %v2066
    %v2083 = vtanh.pop %v2067
    %v2084 = vtanh.pop %v2068
    %v2085 = vtanh.pop %v2069
    %v2086 = vtanh.pop %v2070
    %v2087 = vtanh.pop %v2071
    %v2088 = vtanh.pop %v2072
    %v2089 = vtanh.pop %v2073
    %v2090 = vtanh.pop %v2074
    %v2091 = vtanh.pop %v2075
    %v2092 = vtanh.pop %v2076
    %v2093 = vtanh.pop %v2077
    %v2094 = vtanh.pop %v2078
    %v2095 = vtanh.pop %v2079
    %v2096 = vtanh.pop %v2080
    %v2097 = vsel %vm130, %v2081, -inf
    %v2098 = vsel %vm130, %v2083, -inf
    %v2099 = vsel %vm130, %v2085, -inf
    %v2100 = vmax.f32 %v2097, %v2099
    %v2101 = vsel %vm130, %v2087, -inf
    %v2102 = vmax.f32 %v2098, %v2101
    %v2103 = vsel %vm130, %v2089, -inf
    %v2104 = vmax.f32 %v2100, %v2103
    %v2105 = vsel %vm130, %v2091, -inf
    %v2106 = vmax.f32 %v2102, %v2105
    %v2107 = vsel %vm130, %v2093, -inf
    %v2108 = vmax.f32 %v2104, %v2107
    %v2109 = vsel %vm130, %v2095, -inf
    %v2110 = vmax.f32 %v2106, %v2109
    %v2111 = vmax.f32 %v2108, %v2110
    %v2112 = vsel %vm130, %v2082, -inf
    %v2113 = vsel %vm130, %v2084, -inf
    %v2114 = vsel %vm130, %v2086, -inf
    %v2115 = vmax.f32 %v2112, %v2114
    %v2116 = vsel %vm130, %v2088, -inf
    %v2117 = vmax.f32 %v2113, %v2116
    %v2118 = vsel %vm130, %v2090, -inf
    %v2119 = vmax.f32 %v2115, %v2118
    %v2120 = vsel %vm130, %v2092, -inf
    %v2121 = vmax.f32 %v2117, %v2120
    %v2122 = vsel %vm130, %v2094, -inf
    %v2123 = vmax.f32 %v2119, %v2122
    %v2124 = vsel %vm130, %v2096, -inf
    %v2125 = vmax.f32 %v2121, %v2124
    %v2126 = vmax.f32 %v2123, %v2125
    %v2127 = vld [vmem:[%s8] sm:$0xff]
    %v2128 = vld [vmem:[%s8 + $0x8] sm:$0xff]
    %v2129 = vld [vmem:[%s8 + $0x10] sm:$0xff]
    %v2130 = vld [vmem:[%s8 + $0x18] sm:$0xff]
    %v2131 = vld [vmem:[%s9] sm:$0x1]
    %v2133 = vlaneseq
    %v2134 = vshrl.u32 %v2133, 7
    %v2135 = vsub.s32 0, %v2134
    %v2136 = vrot.slane %v2131, %v2135
    %v2139 = vsel %vm130, %v2111, 0
    %v2142 = vsel %vm130, %v2126, 0
    %2144 = vmatprep.subr.mxu0 0.0
    %2145 = vmatpush1.msra.mxu0 0.0
    %2146 = vmatprep.subr.mxu0 0.0
    %2147 = vmatpush1.msra.mxu0 0.0
    %2148 = vmatprep.subr.mxu0 0.0
    %2149 = vmatpush1.msra.mxu0 0.0
    %2150 = vmatprep.subr.mxu0 0.0
    %2151 = vmatpush1.msra.mxu0 0.0
    %2152 = vmatprep.subr.mxu0 0.0
    %2153 = vmatpush1.msra.mxu0 0.0
    %2154 = vmatprep.subr.mxu0 0.0
    %2155 = vmatpush1.msra.mxu0 0.0
    %2156 = vmatprep.subr.mxu0 0.0
    %2157 = vmatpush1.msra.mxu0 0.0
    %2158 = vmatprep.subr.mxu0 0.0
    %2159 = vmatpush1.msra.mxu0 0.0
    %2160 = vmatprep.subr.mxu0 0.0
    %2161 = vmatpush1.msra.mxu0 0.0
    %2162 = vmatprep.subr.mxu0 0.0
    %2163 = vmatpush1.msra.mxu0 0.0
    %2164 = vmatprep.subr.mxu0 0.0
    %2165 = vmatpush1.msra.mxu0 0.0
    %2166 = vmatprep.subr.mxu0 0.0
    %2167 = vmatpush1.msra.mxu0 0.0
    %2168 = vmatprep.subr.mxu0 0.0
    %2169 = vmatpush1.msra.mxu0 %v2130
    %2170 = vmatprep.subr.mxu0 0.0
    %2171 = vmatpush1.msra.mxu0 %v2129
    %2172 = vmatprep.subr.mxu0 0.0
    %2173 = vmatpush1.msra.mxu0 %v2128
    %2174 = vmatprep.subr.mxu0 0.0
    %2175 = vmatpush1.msra.mxu0 %v2127
    %2176 = vmatprep.subr.mxu0 0.0
    %2177 = vmatpush2.msra.mxu0 0.0
    %2178 = vmatprep.subr.mxu0 0.0
    %2179 = vmatpush2.msra.mxu0 0.0
    %2180 = vmatprep.subr.mxu0 0.0
    %2181 = vmatpush2.msra.mxu0 0.0
    %2182 = vmatprep.subr.mxu0 0.0
    %2183 = vmatpush2.msra.mxu0 0.0
    %2184 = vmatprep.subr.mxu0 0.0
    %2185 = vmatpush2.msra.mxu0 0.0
    %2186 = vmatprep.subr.mxu0 0.0
    %2187 = vmatpush2.msra.mxu0 0.0
    %2188 = vmatprep.subr.mxu0 0.0
    %2189 = vmatpush2.msra.mxu0 0.0
    %2190 = vmatprep.subr.mxu0 0.0
    %2191 = vmatpush2.msra.mxu0 0.0
    %2192 = vmatprep.subr.mxu0 0.0
    %2193 = vmatpush2.msra.mxu0 0.0
    %2194 = vmatprep.subr.mxu0 0.0
    %2195 = vmatpush2.msra.mxu0 0.0
    %2196 = vmatprep.subr.mxu0 0.0
    %2197 = vmatpush2.msra.mxu0 0.0
    %2198 = vmatprep.subr.mxu0 0.0
    %2199 = vmatpush2.msra.mxu0 0.0
    %2200 = vmatprep.subr.mxu0 0.0
    %2201 = vmatpush2.msra.mxu0 0.0
    %2202 = vmatprep.subr.mxu0 0.0
    %2203 = vmatpush2.msra.mxu0 0.0
    %2204 = vmatprep.subr.mxu0 0.0
    %2205 = vmatpush2.msra.mxu0 0.0
    %2206 = vmatprep.subr.mxu0 0.0
    %2207 = vmatpush2.msra.mxu0 0.0
    %2208 = vmatprep.mubr.f32.mxu0 0.0
    %2209 = vmatmul.mubr.f32.gmra.mxu0 %v2139
    %v2210 = vpop.f32.mrf.mxu0
    %v2211 = vadd.f32 %v2136, %v2210
    %v2212 = vpop.f32.mrf.mxu0
    %2213 = vmatprep.mubr.f32.mxu0 0.0
    %2214 = vmatmul.mubr.f32.gmra.mxu0 %v2142
    %v2215 = vpop.f32.mrf.mxu0
    %v2216 = vadd.f32 %v2136, %v2215
    %v2217 = vpop.f32.mrf.mxu0
    %2218 = vdwg.mxu0
    %v2219 = vxor.u32 %v2211, 2147483648
    %v2220 = vxor.u32 %v2216, 2147483648
    %v2221 = vmul.f32 %v2219, 1.442695
    %v2222 = vpow.pop %v2221
    %v2223 = vmul.f32 %v2220, 1.442695
    %v2224 = vpow.pop %v2223
    %v2225 = vadd.f32 %v2222, 1.0
    %v2226 = vadd.f32 %v2224, 1.0
    %v2227 = vrcp.pop %v2225
    %v2228 = vmul.f32 1.0, %v2227
    %v2229 = vrcp.pop %v2226
    %v2230 = vmul.f32 1.0, %v2229
    %vm2231 = vcmask 15360
    %2232 = vst.msk [vmem:[%s10] sm:$0xff] %vm2231, %v2228
    %2233 = vst.msk [vmem:[%s10 + $0x8] sm:$0xff] %vm2231, %v2230
    // Predicated region
    $region62: #{tpu_custom_call.1} parent=1 // pred_check
      _
    $region63: #{tpu_custom_call.1} parent=1 // pred_check_branch
      %2235 = sbr.rel (0) target = $region65
    $region64: #{tpu_custom_call.1} parent=1 // pred_region
      _
    $region65: #{tpu_custom_call.1} parent=1 // pred_fallthru
      _
    // Predicated region
    $region66: #{tpu_custom_call.1} parent=1 // pred_check
      _
    $region67: #{tpu_custom_call.1} parent=1 // pred_check_branch
      %2237 = sbr.rel (0) target = $region69
    $region68: #{tpu_custom_call.1} parent=1 // pred_region
      _
    $region69: #{tpu_custom_call.1} parent=1 // pred_fallthru
      _
    %2238 = vsyncpa [#allocation4], 1
    %2239 = vsyncpa [#allocation6], 1
    %2240 = vsyncpa [#allocation9], 1

</llo_original>
